<compile_context>
chip_gen: v6e
topology: v6e:2x2x1
jax: 0.10.0
libtpu: 0.0.40
codegen_flags: <defaults>
</compile_context>

<pallas_src>
import math

import jax
import jax.numpy as jnp
from jax.experimental import pallas as pl
from jax.experimental.pallas import tpu as pltpu

NUM_HEADS = 2
LN_EPS = 1e-5


def _layernorm_cn(x, w, b):
    """LayerNorm over the channel axis of a channels-first (C, K) tile."""
    mu = jnp.mean(x, axis=0, keepdims=True)
    var = jnp.mean((x - mu) ** 2, axis=0, keepdims=True)
    return (x - mu) * jax.lax.rsqrt(var + LN_EPS) * w + b


def _gelu_exact(x):
    # nn.GELU() default = exact (erf-based) gelu
    return 0.5 * x * (1.0 + jax.lax.erf(x * (1.0 / math.sqrt(2.0))))


def self_attention_kernel(x_ref, ln_w_ref, ln_b_ref, inw_ref, inb_ref,
                          outw_ref, outb_ref, ln2_w_ref, ln2_b_ref,
                          w1_ref, b1_ref, w2_ref, b2_ref, o_ref, qkv_ref):
    qi = pl.program_id(1)
    C = x_ref.shape[1]
    N = x_ref.shape[2]
    TQ = o_ref.shape[2]
    hd = C // NUM_HEADS
    scale = 1.0 / math.sqrt(hd)

    # ---- once per batch element: LayerNorm + fused QKV projection ----------
    # (q-tile axis is the innermost / "arbitrary" axis, so the scratch carries
    #  across all q-tiles of the current batch element.)
    @pl.when(qi == 0)
    def _():
        x = x_ref[0]                                               # (C, N)
        x_ln = _layernorm_cn(x, ln_w_ref[...], ln_b_ref[...])
        qkv = jnp.dot(inw_ref[...], x_ln,
                      preferred_element_type=jnp.float32) + inb_ref[...]  # (3C, N)
        # cache head-separated: slabs 0..H-1 = Q, H..2H-1 = K, 2H..3H-1 = V
        for j in range(3 * NUM_HEADS):
            qkv_ref[j] = qkv[j * hd:(j + 1) * hd, :]

    # ---- this q-tile -------------------------------------------------------
    start = pl.multiple_of(qi * TQ, TQ)                 # TQ is a multiple of 128
    x_t = x_ref[0, :, pl.ds(start, TQ)]                 # (C, TQ) residual

    o_heads = []
    for h in range(NUM_HEADS):                          # static unroll, 2 heads
        qh = qkv_ref[h, :, pl.ds(start, TQ)]            # (hd, TQ)
        kh = qkv_ref[NUM_HEADS + h]                     # (hd, N)
        vh = qkv_ref[2 * NUM_HEADS + h]                 # (hd, N)

        # scores: contraction over the tiny head dim (kept in f32 for accuracy)
        s = jax.lax.dot_general(qh, kh, (((0,), (0,)), ((), ())),
                                preferred_element_type=jnp.float32) * scale  # (TQ, N)
        s = s - jnp.max(s, axis=-1, keepdims=True)
        p = jnp.exp(s)
        # EUP approx reciprocal instead of a VALU divide over TQ*N elements
        p = p * pl.reciprocal(jnp.sum(p, axis=-1, keepdims=True), approx=True)

        # P @ V: the only matmul with a real contraction (K = N) -> bf16 MXU
        # inputs, f32 accumulation.
        oh = jax.lax.dot_general(vh.astype(jnp.bfloat16), p.astype(jnp.bfloat16),
                                 (((1,), (1,)), ((), ())),
                                 preferred_element_type=jnp.float32)         # (hd, TQ)
        o_heads.append(oh)

    # fused out-projection: one matmul over the concatenated heads
    o_all = jnp.concatenate(o_heads, axis=0)                                 # (C, TQ)
    attn = (jnp.dot(outw_ref[...], o_all, preferred_element_type=jnp.float32)
            + outb_ref[...] + x_t)                      # attention out + residual

    # ---- ff_self: LayerNorm -> Linear -> GELU -> Linear, + residual --------
    y = _layernorm_cn(attn, ln2_w_ref[...], ln2_b_ref[...])
    y = jnp.dot(w1_ref[...], y, preferred_element_type=jnp.float32) + b1_ref[...]
    y = _gelu_exact(y)
    y = jnp.dot(w2_ref[...], y, preferred_element_type=jnp.float32) + b2_ref[...]

    o_ref[0] = (y + attn).astype(o_ref.dtype)


def _full_spec(shape):
    zeros = (0,) * len(shape)
    return pl.BlockSpec(shape, lambda b, q, _z=zeros: _z)


def self_attention_forward(x_nchw, params):
    B, C, H, W = x_nchw.shape
    N = H * W
    hd = C // NUM_HEADS
    # native channels-first layout: (B, C, N).  No transposes.
    x = x_nchw.reshape(B, C, N)

    # q-tile size: lane-dense (multiple of 128) tiles enable DMA pipelining
    # across the q axis and bound the per-step (TQ, N) score matrices.
    TQ = 128 if (N % 128 == 0) else N
    n_q = N // TQ

    weight_args = (
        params["ln_w"], params["ln_b"],
        params["in_w"], params["in_b"],
        params["out_w"], params["out_b"],
        params["ln2_w"], params["ln2_b"],
        params["w1"], params["b1"],
        params["w2"], params["b2"],
    )

    in_specs = [pl.BlockSpec((1, C, N), lambda b, q: (b, 0, 0))]
    in_specs += [_full_spec(w.shape) for w in weight_args]
    out_spec = pl.BlockSpec((1, C, TQ), lambda b, q: (b, 0, q))

    # advisory cost estimate so XLA schedules the surrounding graph sensibly
    flops_per_b = (
        2 * (3 * C) * C * N                       # QKV projection
        + NUM_HEADS * (2 * hd * N * N)            # scores
        + NUM_HEADS * (2 * hd * N * N)            # P @ V
        + 2 * C * C * N                           # out projection
        + 2 * (2 * C * C * N)                     # MLP
        + 20 * C * N                              # LN / softmax / residual VPU work
    )
    transc_per_b = NUM_HEADS * N * N + C * N + 2 * N
    param_bytes = sum(int(w.size) * 4 for w in weight_args)
    cost = pl.CostEstimate(
        flops=int(B * flops_per_b),
        transcendentals=int(B * transc_per_b),
        bytes_accessed=int(2 * B * C * N * 4 + param_bytes),
    )

    out = pl.pallas_call(
        self_attention_kernel,
        out_shape=jax.ShapeDtypeStruct((B, C, N), x.dtype),
        grid_spec=pltpu.PrefetchScalarGridSpec(
            num_scalar_prefetch=0,
            grid=(B, n_q),
            in_specs=in_specs,
            out_specs=out_spec,
            scratch_shapes=[pltpu.VMEM((3 * NUM_HEADS, hd, N), jnp.float32)],
        ),
        compiler_params=pltpu.CompilerParams(
            dimension_semantics=("parallel", "arbitrary"),
            vmem_limit_bytes=32 * 1024 * 1024,
        ),
        cost_estimate=cost,
    )(x, *weight_args)

    return out.reshape(B, C, H, W)


def make_params(key, channels):
    C = channels
    ks = jax.random.split(key, 8)
    s = 0.2
    return dict(
        ln_w=jnp.ones((C, 1), jnp.float32),
        ln_b=jnp.zeros((C, 1), jnp.float32),
        in_w=s * jax.random.normal(ks[0], (3 * C, C), jnp.float32),
        in_b=s * jax.random.normal(ks[1], (3 * C, 1), jnp.float32),
        out_w=s * jax.random.normal(ks[2], (C, C), jnp.float32),
        out_b=s * jax.random.normal(ks[3], (C, 1), jnp.float32),
        ln2_w=jnp.ones((C, 1), jnp.float32),
        ln2_b=jnp.zeros((C, 1), jnp.float32),
        w1=s * jax.random.normal(ks[4], (C, C), jnp.float32),
        b1=s * jax.random.normal(ks[5], (C, 1), jnp.float32),
        w2=s * jax.random.normal(ks[6], (C, C), jnp.float32),
        b2=s * jax.random.normal(ks[7], (C, 1), jnp.float32),
    )


def reference_forward(x_nchw, params):
    """Pure-JAX f32 reference of the same math (mirrors the PyTorch module)."""
    B, C, H, W = x_nchw.shape
    N = H * W
    hd = C // NUM_HEADS
    x = x_nchw.reshape(B, C, N)                                  # (B, C, N)

    def ln(t, w, b):
        mu = jnp.mean(t, axis=1, keepdims=True)
        var = jnp.mean((t - mu) ** 2, axis=1, keepdims=True)
        return (t - mu) * jax.lax.rsqrt(var + LN_EPS) * w[None] + b[None]

    x_ln = ln(x, params["ln_w"], params["ln_b"])
    qkv = jnp.einsum("oc,bcn->bon", params["in_w"], x_ln) + params["in_b"][None]
    q, k, v = qkv[:, :C], qkv[:, C:2 * C], qkv[:, 2 * C:]
    q4 = q.reshape(B, NUM_HEADS, hd, N)
    k4 = k.reshape(B, NUM_HEADS, hd, N)
    v4 = v.reshape(B, NUM_HEADS, hd, N)
    s = jnp.einsum("bhdq,bhdk->bhqk", q4, k4) / math.sqrt(hd)
    p = jax.nn.softmax(s, axis=-1)
    o = jnp.einsum("bhqk,bhdk->bhdq", p, v4).reshape(B, C, N)
    attn = jnp.einsum("oc,bcn->bon", params["out_w"], o) + params["out_b"][None] + x
    y = ln(attn, params["ln2_w"], params["ln2_b"])
    y = jnp.einsum("oc,bcn->bon", params["w1"], y) + params["b1"][None]
    y = _gelu_exact(y)
    y = jnp.einsum("oc,bcn->bon", params["w2"], y) + params["b2"][None]
    return (y + attn).reshape(B, C, H, W)


if __name__ == "__main__":
    B, C, SIZE = 2, 4, 16          # channels=4, spatial=16 -> N=256, 2 heads (hd=2)
    key = jax.random.PRNGKey(0)
    k_x, k_p = jax.random.split(key)
    x = jax.random.normal(k_x, (B, C, SIZE, SIZE), jnp.float32)
    params = make_params(k_p, C)

    out = self_attention_forward(x, params)
    jax.block_until_ready(out)

    ref = reference_forward(x, params)
    assert out.shape == (B, C, SIZE, SIZE)
    # tolerance loosened slightly for bf16 MXU inputs + approx reciprocal
    assert jnp.allclose(out, ref, rtol=2e-2, atol=2e-2), "mismatch vs JAX reference"
    print("KERNEL_OK")
</pallas_src>

<mosaic_0001>
module attributes {stable_mosaic.version = 11 : i64} {
  func.func @self_attention_kernel(%arg0: i32, %arg1: i32, %arg2: memref<1x4x256xf32, #tpu.memory_space<vmem>>, %arg3: memref<4x1xf32, #tpu.memory_space<vmem>>, %arg4: memref<4x1xf32, #tpu.memory_space<vmem>>, %arg5: memref<12x4xf32, #tpu.memory_space<vmem>>, %arg6: memref<12x1xf32, #tpu.memory_space<vmem>>, %arg7: memref<4x4xf32, #tpu.memory_space<vmem>>, %arg8: memref<4x1xf32, #tpu.memory_space<vmem>>, %arg9: memref<4x1xf32, #tpu.memory_space<vmem>>, %arg10: memref<4x1xf32, #tpu.memory_space<vmem>>, %arg11: memref<4x4xf32, #tpu.memory_space<vmem>>, %arg12: memref<4x1xf32, #tpu.memory_space<vmem>>, %arg13: memref<4x4xf32, #tpu.memory_space<vmem>>, %arg14: memref<4x1xf32, #tpu.memory_space<vmem>>, %arg15: memref<1x4x128xf32, #tpu.memory_space<vmem>>, %arg16: memref<6x2x256xf32, #tpu.memory_space<vmem>>) attributes {dimension_semantics = [#tpu.dimension_semantics<parallel>, #tpu.dimension_semantics<arbitrary>], iteration_bounds = array<i64: 2, 2>, scalar_prefetch = 0 : i64, scratch_operands = 1 : i64, tpu.core_type = #tpu.core_type<tc>, window_params = [{transform_indices = @transform_0, window_bounds = array<i64: 1, 4, 256>}, {pipeline_mode = #tpu.pipeline_mode<synchronous>, transform_indices = @transform_1, window_bounds = array<i64: 4, 1>}, {pipeline_mode = #tpu.pipeline_mode<synchronous>, transform_indices = @transform_2, window_bounds = array<i64: 4, 1>}, {pipeline_mode = #tpu.pipeline_mode<synchronous>, transform_indices = @transform_3, window_bounds = array<i64: 12, 4>}, {pipeline_mode = #tpu.pipeline_mode<synchronous>, transform_indices = @transform_4, window_bounds = array<i64: 12, 1>}, {pipeline_mode = #tpu.pipeline_mode<synchronous>, transform_indices = @transform_5, window_bounds = array<i64: 4, 4>}, {pipeline_mode = #tpu.pipeline_mode<synchronous>, transform_indices = @transform_6, window_bounds = array<i64: 4, 1>}, {pipeline_mode = #tpu.pipeline_mode<synchronous>, transform_indices = @transform_7, window_bounds = array<i64: 4, 1>}, {pipeline_mode = #tpu.pipeline_mode<synchronous>, transform_indices = @transform_8, window_bounds = array<i64: 4, 1>}, {pipeline_mode = #tpu.pipeline_mode<synchronous>, transform_indices = @transform_9, window_bounds = array<i64: 4, 4>}, {pipeline_mode = #tpu.pipeline_mode<synchronous>, transform_indices = @transform_10, window_bounds = array<i64: 4, 1>}, {pipeline_mode = #tpu.pipeline_mode<synchronous>, transform_indices = @transform_11, window_bounds = array<i64: 4, 4>}, {pipeline_mode = #tpu.pipeline_mode<synchronous>, transform_indices = @transform_12, window_bounds = array<i64: 4, 1>}, {transform_indices = @transform_13, window_bounds = array<i64: 1, 4, 128>}]} {
    %c0_i32 = arith.constant 0 : i32
    %0 = arith.cmpi eq, %arg1, %c0_i32 : i32
    %1 = arith.extui %0 : i1 to i32
    %c0_i32_0 = arith.constant 0 : i32
    %2 = arith.cmpi ne, %1, %c0_i32_0 : i32
    scf.if %2 {
      %c0_52 = arith.constant 0 : index
      %c0_53 = arith.constant 0 : index
      %c0_54 = arith.constant 0 : index
      %107 = vector.load %arg2[%c0_52, %c0_53, %c0_54] : memref<1x4x256xf32, #tpu.memory_space<vmem>>, vector<1x4x256xf32>
      %108 = vector.shape_cast %107 : vector<1x4x256xf32> to vector<4x256xf32>
      %c0_55 = arith.constant 0 : index
      %c0_56 = arith.constant 0 : index
      %109 = vector.load %arg3[%c0_55, %c0_56] : memref<4x1xf32, #tpu.memory_space<vmem>>, vector<4x1xf32>
      %c0_57 = arith.constant 0 : index
      %c0_58 = arith.constant 0 : index
      %110 = vector.load %arg4[%c0_57, %c0_58] : memref<4x1xf32, #tpu.memory_space<vmem>>, vector<4x1xf32>
      %cst_59 = arith.constant dense<0.000000e+00> : vector<256xf32>
      %111 = vector.multi_reduction <add>, %108, %cst_59 [0] : vector<4x256xf32> to vector<256xf32>
      %112 = vector.shape_cast %111 : vector<256xf32> to vector<1x256xf32>
      %cst_60 = arith.constant 4.000000e+00 : f32
      %113 = vector.broadcast %cst_60 : f32 to vector<1x256xf32>
      %114 = arith.divf %112, %113 : vector<1x256xf32>
      %115 = vector.broadcast %114 : vector<1x256xf32> to vector<4x256xf32>
      %116 = arith.subf %108, %115 : vector<4x256xf32>
      %117 = arith.mulf %116, %116 : vector<4x256xf32>
      %cst_61 = arith.constant dense<0.000000e+00> : vector<256xf32>
      %118 = vector.multi_reduction <add>, %117, %cst_61 [0] : vector<4x256xf32> to vector<256xf32>
      %119 = vector.shape_cast %118 : vector<256xf32> to vector<1x256xf32>
      %cst_62 = arith.constant 4.000000e+00 : f32
      %120 = vector.broadcast %cst_62 : f32 to vector<1x256xf32>
      %121 = arith.divf %119, %120 : vector<1x256xf32>
      %122 = vector.broadcast %114 : vector<1x256xf32> to vector<4x256xf32>
      %123 = arith.subf %108, %122 : vector<4x256xf32>
      %cst_63 = arith.constant 9.99999974E-6 : f32
      %124 = vector.broadcast %cst_63 : f32 to vector<1x256xf32>
      %125 = arith.addf %121, %124 : vector<1x256xf32>
      %126 = math.rsqrt %125 : vector<1x256xf32>
      %127 = vector.broadcast %126 : vector<1x256xf32> to vector<4x256xf32>
      %128 = arith.mulf %123, %127 : vector<4x256xf32>
      %129 = vector.broadcast %109 : vector<4x1xf32> to vector<4x256xf32>
      %130 = arith.mulf %128, %129 : vector<4x256xf32>
      %131 = vector.broadcast %110 : vector<4x1xf32> to vector<4x256xf32>
      %132 = arith.addf %130, %131 : vector<4x256xf32>
      %c0_64 = arith.constant 0 : index
      %c0_65 = arith.constant 0 : index
      %133 = vector.load %arg5[%c0_64, %c0_65] : memref<12x4xf32, #tpu.memory_space<vmem>>, vector<12x4xf32>
      %cst_66 = arith.constant dense<0.000000e+00> : vector<12x256xf32>
      %134 = tpu.matmul %133, %132, %cst_66 {dimension_numbers = #tpu.dot_dimension_numbers<[1], [0], [0], [1], [0, 0, 1, 1], [], []>} : vector<12x4xf32>, vector<4x256xf32>, vector<12x256xf32> -> vector<12x256xf32>
      %c0_67 = arith.constant 0 : index
      %c0_68 = arith.constant 0 : index
      %135 = vector.load %arg6[%c0_67, %c0_68] : memref<12x1xf32, #tpu.memory_space<vmem>>, vector<12x1xf32>
      %136 = vector.broadcast %135 : vector<12x1xf32> to vector<12x256xf32>
      %137 = arith.addf %134, %136 : vector<12x256xf32>
      %138 = vector.extract_strided_slice %137 {offsets = [0, 0], sizes = [2, 256], strides = [1, 1]} : vector<12x256xf32> to vector<2x256xf32>
      %c0_69 = arith.constant 0 : index
      %c0_70 = arith.constant 0 : index
      %c0_71 = arith.constant 0 : index
      %139 = vector.load %arg16[%c0_69, %c0_70, %c0_71] : memref<6x2x256xf32, #tpu.memory_space<vmem>>, vector<1x2x256xf32>
      %140 = vector.shape_cast %139 : vector<1x2x256xf32> to vector<2x256xf32>
      %141 = vector.shape_cast %138 : vector<2x256xf32> to vector<1x2x256xf32>
      tpu.vector_store %arg16[%c0_69, %c0_70, %c0_71], %141 {strides = array<i32>} : memref<6x2x256xf32, #tpu.memory_space<vmem>>, vector<1x2x256xf32>,
      %142 = vector.extract_strided_slice %137 {offsets = [2, 0], sizes = [2, 256], strides = [1, 1]} : vector<12x256xf32> to vector<2x256xf32>
      %c1_72 = arith.constant 1 : index
      %c0_73 = arith.constant 0 : index
      %c0_74 = arith.constant 0 : index
      %143 = vector.load %arg16[%c1_72, %c0_73, %c0_74] : memref<6x2x256xf32, #tpu.memory_space<vmem>>, vector<1x2x256xf32>
      %144 = vector.shape_cast %143 : vector<1x2x256xf32> to vector<2x256xf32>
      %145 = vector.shape_cast %142 : vector<2x256xf32> to vector<1x2x256xf32>
      tpu.vector_store %arg16[%c1_72, %c0_73, %c0_74], %145 {strides = array<i32>} : memref<6x2x256xf32, #tpu.memory_space<vmem>>, vector<1x2x256xf32>,
      %146 = vector.extract_strided_slice %137 {offsets = [4, 0], sizes = [2, 256], strides = [1, 1]} : vector<12x256xf32> to vector<2x256xf32>
      %c2_75 = arith.constant 2 : index
      %c0_76 = arith.constant 0 : index
      %c0_77 = arith.constant 0 : index
      %147 = vector.load %arg16[%c2_75, %c0_76, %c0_77] : memref<6x2x256xf32, #tpu.memory_space<vmem>>, vector<1x2x256xf32>
      %148 = vector.shape_cast %147 : vector<1x2x256xf32> to vector<2x256xf32>
      %149 = vector.shape_cast %146 : vector<2x256xf32> to vector<1x2x256xf32>
      tpu.vector_store %arg16[%c2_75, %c0_76, %c0_77], %149 {strides = array<i32>} : memref<6x2x256xf32, #tpu.memory_space<vmem>>, vector<1x2x256xf32>,
      %150 = vector.extract_strided_slice %137 {offsets = [6, 0], sizes = [2, 256], strides = [1, 1]} : vector<12x256xf32> to vector<2x256xf32>
      %c3_78 = arith.constant 3 : index
      %c0_79 = arith.constant 0 : index
      %c0_80 = arith.constant 0 : index
      %151 = vector.load %arg16[%c3_78, %c0_79, %c0_80] : memref<6x2x256xf32, #tpu.memory_space<vmem>>, vector<1x2x256xf32>
      %152 = vector.shape_cast %151 : vector<1x2x256xf32> to vector<2x256xf32>
      %153 = vector.shape_cast %150 : vector<2x256xf32> to vector<1x2x256xf32>
      tpu.vector_store %arg16[%c3_78, %c0_79, %c0_80], %153 {strides = array<i32>} : memref<6x2x256xf32, #tpu.memory_space<vmem>>, vector<1x2x256xf32>,
      %154 = vector.extract_strided_slice %137 {offsets = [8, 0], sizes = [2, 256], strides = [1, 1]} : vector<12x256xf32> to vector<2x256xf32>
      %c4_81 = arith.constant 4 : index
      %c0_82 = arith.constant 0 : index
      %c0_83 = arith.constant 0 : index
      %155 = vector.load %arg16[%c4_81, %c0_82, %c0_83] : memref<6x2x256xf32, #tpu.memory_space<vmem>>, vector<1x2x256xf32>
      %156 = vector.shape_cast %155 : vector<1x2x256xf32> to vector<2x256xf32>
      %157 = vector.shape_cast %154 : vector<2x256xf32> to vector<1x2x256xf32>
      tpu.vector_store %arg16[%c4_81, %c0_82, %c0_83], %157 {strides = array<i32>} : memref<6x2x256xf32, #tpu.memory_space<vmem>>, vector<1x2x256xf32>,
      %158 = vector.extract_strided_slice %137 {offsets = [10, 0], sizes = [2, 256], strides = [1, 1]} : vector<12x256xf32> to vector<2x256xf32>
      %c5_84 = arith.constant 5 : index
      %c0_85 = arith.constant 0 : index
      %c0_86 = arith.constant 0 : index
      %159 = vector.load %arg16[%c5_84, %c0_85, %c0_86] : memref<6x2x256xf32, #tpu.memory_space<vmem>>, vector<1x2x256xf32>
      %160 = vector.shape_cast %159 : vector<1x2x256xf32> to vector<2x256xf32>
      %161 = vector.shape_cast %158 : vector<2x256xf32> to vector<1x2x256xf32>
      tpu.vector_store %arg16[%c5_84, %c0_85, %c0_86], %161 {strides = array<i32>} : memref<6x2x256xf32, #tpu.memory_space<vmem>>, vector<1x2x256xf32>,
    } else {
    }
    %c128_i32 = arith.constant 128 : i32
    %3 = arith.muli %arg1, %c128_i32 : i32
    %4 = tpu.assume_multiple %3, 128 : i32
    %c0 = arith.constant 0 : index
    %c0_1 = arith.constant 0 : index
    %5 = arith.index_cast %4 : i32 to index
    %6 = vector.load %arg2[%c0, %c0_1, %5] : memref<1x4x256xf32, #tpu.memory_space<vmem>>, vector<1x4x128xf32>
    %7 = vector.shape_cast %6 : vector<1x4x128xf32> to vector<4x128xf32>
    %c0_2 = arith.constant 0 : index
    %c0_3 = arith.constant 0 : index
    %8 = arith.index_cast %4 : i32 to index
    %9 = vector.load %arg16[%c0_2, %c0_3, %8] : memref<6x2x256xf32, #tpu.memory_space<vmem>>, vector<1x2x128xf32>
    %10 = vector.shape_cast %9 : vector<1x2x128xf32> to vector<2x128xf32>
    %c2 = arith.constant 2 : index
    %c0_4 = arith.constant 0 : index
    %c0_5 = arith.constant 0 : index
    %11 = vector.load %arg16[%c2, %c0_4, %c0_5] : memref<6x2x256xf32, #tpu.memory_space<vmem>>, vector<1x2x256xf32>
    %12 = vector.shape_cast %11 : vector<1x2x256xf32> to vector<2x256xf32>
    %c4 = arith.constant 4 : index
    %c0_6 = arith.constant 0 : index
    %c0_7 = arith.constant 0 : index
    %13 = vector.load %arg16[%c4, %c0_6, %c0_7] : memref<6x2x256xf32, #tpu.memory_space<vmem>>, vector<1x2x256xf32>
    %14 = vector.shape_cast %13 : vector<1x2x256xf32> to vector<2x256xf32>
    %cst = arith.constant dense<0.000000e+00> : vector<128x256xf32>
    %15 = tpu.matmul %10, %12, %cst {dimension_numbers = #tpu.dot_dimension_numbers<[0], [0], [1], [1], [0, 1, 1, 1], [], []>} : vector<2x128xf32>, vector<2x256xf32>, vector<128x256xf32> -> vector<128x256xf32>
    %cst_8 = arith.constant 0.707106769 : f32
    %16 = vector.broadcast %cst_8 : f32 to vector<128x256xf32>
    %17 = arith.mulf %15, %16 : vector<128x256xf32>
    %cst_9 = arith.constant dense<0xFF800000> : vector<128xf32>
    %18 = vector.multi_reduction <maximumf>, %17, %cst_9 [1] : vector<128x256xf32> to vector<128xf32>
    %19 = vector.shape_cast %18 : vector<128xf32> to vector<128x1xf32>
    %20 = vector.broadcast %19 : vector<128x1xf32> to vector<128x256xf32>
    %21 = arith.subf %17, %20 : vector<128x256xf32>
    %22 = math.exp %21 : vector<128x256xf32>
    %cst_10 = arith.constant dense<0.000000e+00> : vector<128xf32>
    %23 = vector.multi_reduction <add>, %22, %cst_10 [1] : vector<128x256xf32> to vector<128xf32>
    %24 = vector.shape_cast %23 : vector<128xf32> to vector<128x1xf32>
    %25 = tpu.reciprocal %24 {approx = true} : vector<128x1xf32> -> vector<128x1xf32>
    %26 = vector.broadcast %25 : vector<128x1xf32> to vector<128x256xf32>
    %27 = arith.mulf %22, %26 : vector<128x256xf32>
    %28 = arith.truncf %14 : vector<2x256xf32> to vector<2x256xbf16>
    %29 = arith.truncf %27 : vector<128x256xf32> to vector<128x256xbf16>
    %cst_11 = arith.constant dense<0.000000e+00> : vector<2x128xf32>
    %30 = tpu.matmul %28, %29, %cst_11 {dimension_numbers = #tpu.dot_dimension_numbers<[1], [1], [0], [0], [0, 0, 1, 0], [], []>} : vector<2x256xbf16>, vector<128x256xbf16>, vector<2x128xf32> -> vector<2x128xf32>
    %c1 = arith.constant 1 : index
    %c0_12 = arith.constant 0 : index
    %31 = arith.index_cast %4 : i32 to index
    %32 = vector.load %arg16[%c1, %c0_12, %31] : memref<6x2x256xf32, #tpu.memory_space<vmem>>, vector<1x2x128xf32>
    %33 = vector.shape_cast %32 : vector<1x2x128xf32> to vector<2x128xf32>
    %c3 = arith.constant 3 : index
    %c0_13 = arith.constant 0 : index
    %c0_14 = arith.constant 0 : index
    %34 = vector.load %arg16[%c3, %c0_13, %c0_14] : memref<6x2x256xf32, #tpu.memory_space<vmem>>, vector<1x2x256xf32>
    %35 = vector.shape_cast %34 : vector<1x2x256xf32> to vector<2x256xf32>
    %c5 = arith.constant 5 : index
    %c0_15 = arith.constant 0 : index
    %c0_16 = arith.constant 0 : index
    %36 = vector.load %arg16[%c5, %c0_15, %c0_16] : memref<6x2x256xf32, #tpu.memory_space<vmem>>, vector<1x2x256xf32>
    %37 = vector.shape_cast %36 : vector<1x2x256xf32> to vector<2x256xf32>
    %cst_17 = arith.constant dense<0.000000e+00> : vector<128x256xf32>
    %38 = tpu.matmul %33, %35, %cst_17 {dimension_numbers = #tpu.dot_dimension_numbers<[0], [0], [1], [1], [0, 1, 1, 1], [], []>} : vector<2x128xf32>, vector<2x256xf32>, vector<128x256xf32> -> vector<128x256xf32>
    %cst_18 = arith.constant 0.707106769 : f32
    %39 = vector.broadcast %cst_18 : f32 to vector<128x256xf32>
    %40 = arith.mulf %38, %39 : vector<128x256xf32>
    %cst_19 = arith.constant dense<0xFF800000> : vector<128xf32>
    %41 = vector.multi_reduction <maximumf>, %40, %cst_19 [1] : vector<128x256xf32> to vector<128xf32>
    %42 = vector.shape_cast %41 : vector<128xf32> to vector<128x1xf32>
    %43 = vector.broadcast %42 : vector<128x1xf32> to vector<128x256xf32>
    %44 = arith.subf %40, %43 : vector<128x256xf32>
    %45 = math.exp %44 : vector<128x256xf32>
    %cst_20 = arith.constant dense<0.000000e+00> : vector<128xf32>
    %46 = vector.multi_reduction <add>, %45, %cst_20 [1] : vector<128x256xf32> to vector<128xf32>
    %47 = vector.shape_cast %46 : vector<128xf32> to vector<128x1xf32>
    %48 = tpu.reciprocal %47 {approx = true} : vector<128x1xf32> -> vector<128x1xf32>
    %49 = vector.broadcast %48 : vector<128x1xf32> to vector<128x256xf32>
    %50 = arith.mulf %45, %49 : vector<128x256xf32>
    %51 = arith.truncf %37 : vector<2x256xf32> to vector<2x256xbf16>
    %52 = arith.truncf %50 : vector<128x256xf32> to vector<128x256xbf16>
    %cst_21 = arith.constant dense<0.000000e+00> : vector<2x128xf32>
    %53 = tpu.matmul %51, %52, %cst_21 {dimension_numbers = #tpu.dot_dimension_numbers<[1], [1], [0], [0], [0, 0, 1, 0], [], []>} : vector<2x256xbf16>, vector<128x256xbf16>, vector<2x128xf32> -> vector<2x128xf32>
    %54 = tpu.concatenate %30, %53 in 0 : vector<2x128xf32>, vector<2x128xf32> -> vector<4x128xf32>
    %c0_22 = arith.constant 0 : index
    %c0_23 = arith.constant 0 : index
    %55 = vector.load %arg7[%c0_22, %c0_23] : memref<4x4xf32, #tpu.memory_space<vmem>>, vector<4x4xf32>
    %cst_24 = arith.constant dense<0.000000e+00> : vector<4x128xf32>
    %56 = tpu.matmul %55, %54, %cst_24 {dimension_numbers = #tpu.dot_dimension_numbers<[1], [0], [0], [1], [0, 0, 1, 1], [], []>} : vector<4x4xf32>, vector<4x128xf32>, vector<4x128xf32> -> vector<4x128xf32>
    %c0_25 = arith.constant 0 : index
    %c0_26 = arith.constant 0 : index
    %57 = vector.load %arg8[%c0_25, %c0_26] : memref<4x1xf32, #tpu.memory_space<vmem>>, vector<4x1xf32>
    %58 = vector.broadcast %57 : vector<4x1xf32> to vector<4x128xf32>
    %59 = arith.addf %56, %58 : vector<4x128xf32>
    %60 = arith.addf %59, %7 : vector<4x128xf32>
    %c0_27 = arith.constant 0 : index
    %c0_28 = arith.constant 0 : index
    %61 = vector.load %arg9[%c0_27, %c0_28] : memref<4x1xf32, #tpu.memory_space<vmem>>, vector<4x1xf32>
    %c0_29 = arith.constant 0 : index
    %c0_30 = arith.constant 0 : index
    %62 = vector.load %arg10[%c0_29, %c0_30] : memref<4x1xf32, #tpu.memory_space<vmem>>, vector<4x1xf32>
    %cst_31 = arith.constant dense<0.000000e+00> : vector<128xf32>
    %63 = vector.multi_reduction <add>, %60, %cst_31 [0] : vector<4x128xf32> to vector<128xf32>
    %64 = vector.shape_cast %63 : vector<128xf32> to vector<1x128xf32>
    %cst_32 = arith.constant 4.000000e+00 : f32
    %65 = vector.broadcast %cst_32 : f32 to vector<1x128xf32>
    %66 = arith.divf %64, %65 : vector<1x128xf32>
    %67 = vector.broadcast %66 : vector<1x128xf32> to vector<4x128xf32>
    %68 = arith.subf %60, %67 : vector<4x128xf32>
    %69 = arith.mulf %68, %68 : vector<4x128xf32>
    %cst_33 = arith.constant dense<0.000000e+00> : vector<128xf32>
    %70 = vector.multi_reduction <add>, %69, %cst_33 [0] : vector<4x128xf32> to vector<128xf32>
    %71 = vector.shape_cast %70 : vector<128xf32> to vector<1x128xf32>
    %cst_34 = arith.constant 4.000000e+00 : f32
    %72 = vector.broadcast %cst_34 : f32 to vector<1x128xf32>
    %73 = arith.divf %71, %72 : vector<1x128xf32>
    %74 = vector.broadcast %66 : vector<1x128xf32> to vector<4x128xf32>
    %75 = arith.subf %60, %74 : vector<4x128xf32>
    %cst_35 = arith.constant 9.99999974E-6 : f32
    %76 = vector.broadcast %cst_35 : f32 to vector<1x128xf32>
    %77 = arith.addf %73, %76 : vector<1x128xf32>
    %78 = math.rsqrt %77 : vector<1x128xf32>
    %79 = vector.broadcast %78 : vector<1x128xf32> to vector<4x128xf32>
    %80 = arith.mulf %75, %79 : vector<4x128xf32>
    %81 = vector.broadcast %61 : vector<4x1xf32> to vector<4x128xf32>
    %82 = arith.mulf %80, %81 : vector<4x128xf32>
    %83 = vector.broadcast %62 : vector<4x1xf32> to vector<4x128xf32>
    %84 = arith.addf %82, %83 : vector<4x128xf32>
    %c0_36 = arith.constant 0 : index
    %c0_37 = arith.constant 0 : index
    %85 = vector.load %arg11[%c0_36, %c0_37] : memref<4x4xf32, #tpu.memory_space<vmem>>, vector<4x4xf32>
    %cst_38 = arith.constant dense<0.000000e+00> : vector<4x128xf32>
    %86 = tpu.matmul %85, %84, %cst_38 {dimension_numbers = #tpu.dot_dimension_numbers<[1], [0], [0], [1], [0, 0, 1, 1], [], []>} : vector<4x4xf32>, vector<4x128xf32>, vector<4x128xf32> -> vector<4x128xf32>
    %c0_39 = arith.constant 0 : index
    %c0_40 = arith.constant 0 : index
    %87 = vector.load %arg12[%c0_39, %c0_40] : memref<4x1xf32, #tpu.memory_space<vmem>>, vector<4x1xf32>
    %88 = vector.broadcast %87 : vector<4x1xf32> to vector<4x128xf32>
    %89 = arith.addf %86, %88 : vector<4x128xf32>
    %cst_41 = arith.constant 5.000000e-01 : f32
    %90 = vector.broadcast %cst_41 : f32 to vector<4x128xf32>
    %91 = arith.mulf %90, %89 : vector<4x128xf32>
    %cst_42 = arith.constant 0.707106769 : f32
    %92 = vector.broadcast %cst_42 : f32 to vector<4x128xf32>
    %93 = arith.mulf %89, %92 : vector<4x128xf32>
    %94 = math.erf %93 : vector<4x128xf32>
    %cst_43 = arith.constant 1.000000e+00 : f32
    %95 = vector.broadcast %cst_43 : f32 to vector<4x128xf32>
    %96 = arith.addf %95, %94 : vector<4x128xf32>
    %97 = arith.mulf %91, %96 : vector<4x128xf32>
    %c0_44 = arith.constant 0 : index
    %c0_45 = arith.constant 0 : index
    %98 = vector.load %arg13[%c0_44, %c0_45] : memref<4x4xf32, #tpu.memory_space<vmem>>, vector<4x4xf32>
    %cst_46 = arith.constant dense<0.000000e+00> : vector<4x128xf32>
    %99 = tpu.matmul %98, %97, %cst_46 {dimension_numbers = #tpu.dot_dimension_numbers<[1], [0], [0], [1], [0, 0, 1, 1], [], []>} : vector<4x4xf32>, vector<4x128xf32>, vector<4x128xf32> -> vector<4x128xf32>
    %c0_47 = arith.constant 0 : index
    %c0_48 = arith.constant 0 : index
    %100 = vector.load %arg14[%c0_47, %c0_48] : memref<4x1xf32, #tpu.memory_space<vmem>>, vector<4x1xf32>
    %101 = vector.broadcast %100 : vector<4x1xf32> to vector<4x128xf32>
    %102 = arith.addf %99, %101 : vector<4x128xf32>
    %103 = arith.addf %102, %60 : vector<4x128xf32>
    %c0_49 = arith.constant 0 : index
    %c0_50 = arith.constant 0 : index
    %c0_51 = arith.constant 0 : index
    %104 = vector.load %arg15[%c0_49, %c0_50, %c0_51] : memref<1x4x128xf32, #tpu.memory_space<vmem>>, vector<1x4x128xf32>
    %105 = vector.shape_cast %104 : vector<1x4x128xf32> to vector<4x128xf32>
    %106 = vector.shape_cast %103 : vector<4x128xf32> to vector<1x4x128xf32>
    tpu.vector_store %arg15[%c0_49, %c0_50, %c0_51], %106 {strides = array<i32>} : memref<1x4x128xf32, #tpu.memory_space<vmem>>, vector<1x4x128xf32>,
    return
  }
  func.func @transform_0(%arg0: i32, %arg1: i32) -> (i32, i32, i32) {
    %c0_i32 = arith.constant 0 : i32
    %c0_i32_0 = arith.constant 0 : i32
    %c0_i32_1 = arith.constant 0 : i32
    return %arg0, %c0_i32, %c0_i32_0 : i32, i32, i32
  }
  func.func @transform_1(%arg0: i32, %arg1: i32) -> (i32, i32) {
    %c0_i32 = arith.constant 0 : i32
    %c0_i32_0 = arith.constant 0 : i32
    %c0_i32_1 = arith.constant 0 : i32
    return %c0_i32, %c0_i32_0 : i32, i32
  }
  func.func @transform_2(%arg0: i32, %arg1: i32) -> (i32, i32) {
    %c0_i32 = arith.constant 0 : i32
    %c0_i32_0 = arith.constant 0 : i32
    %c0_i32_1 = arith.constant 0 : i32
    return %c0_i32, %c0_i32_0 : i32, i32
  }
  func.func @transform_3(%arg0: i32, %arg1: i32) -> (i32, i32) {
    %c0_i32 = arith.constant 0 : i32
    %c0_i32_0 = arith.constant 0 : i32
    %c0_i32_1 = arith.constant 0 : i32
    return %c0_i32, %c0_i32_0 : i32, i32
  }
  func.func @transform_4(%arg0: i32, %arg1: i32) -> (i32, i32) {
    %c0_i32 = arith.constant 0 : i32
    %c0_i32_0 = arith.constant 0 : i32
    %c0_i32_1 = arith.constant 0 : i32
    return %c0_i32, %c0_i32_0 : i32, i32
  }
  func.func @transform_5(%arg0: i32, %arg1: i32) -> (i32, i32) {
    %c0_i32 = arith.constant 0 : i32
    %c0_i32_0 = arith.constant 0 : i32
    %c0_i32_1 = arith.constant 0 : i32
    return %c0_i32, %c0_i32_0 : i32, i32
  }
  func.func @transform_6(%arg0: i32, %arg1: i32) -> (i32, i32) {
    %c0_i32 = arith.constant 0 : i32
    %c0_i32_0 = arith.constant 0 : i32
    %c0_i32_1 = arith.constant 0 : i32
    return %c0_i32, %c0_i32_0 : i32, i32
  }
  func.func @transform_7(%arg0: i32, %arg1: i32) -> (i32, i32) {
    %c0_i32 = arith.constant 0 : i32
    %c0_i32_0 = arith.constant 0 : i32
    %c0_i32_1 = arith.constant 0 : i32
    return %c0_i32, %c0_i32_0 : i32, i32
  }
  func.func @transform_8(%arg0: i32, %arg1: i32) -> (i32, i32) {
    %c0_i32 = arith.constant 0 : i32
    %c0_i32_0 = arith.constant 0 : i32
    %c0_i32_1 = arith.constant 0 : i32
    return %c0_i32, %c0_i32_0 : i32, i32
  }
  func.func @transform_9(%arg0: i32, %arg1: i32) -> (i32, i32) {
    %c0_i32 = arith.constant 0 : i32
    %c0_i32_0 = arith.constant 0 : i32
    %c0_i32_1 = arith.constant 0 : i32
    return %c0_i32, %c0_i32_0 : i32, i32
  }
  func.func @transform_10(%arg0: i32, %arg1: i32) -> (i32, i32) {
    %c0_i32 = arith.constant 0 : i32
    %c0_i32_0 = arith.constant 0 : i32
    %c0_i32_1 = arith.constant 0 : i32
    return %c0_i32, %c0_i32_0 : i32, i32
  }
  func.func @transform_11(%arg0: i32, %arg1: i32) -> (i32, i32) {
    %c0_i32 = arith.constant 0 : i32
    %c0_i32_0 = arith.constant 0 : i32
    %c0_i32_1 = arith.constant 0 : i32
    return %c0_i32, %c0_i32_0 : i32, i32
  }
  func.func @transform_12(%arg0: i32, %arg1: i32) -> (i32, i32) {
    %c0_i32 = arith.constant 0 : i32
    %c0_i32_0 = arith.constant 0 : i32
    %c0_i32_1 = arith.constant 0 : i32
    return %c0_i32, %c0_i32_0 : i32, i32
  }
  func.func @transform_13(%arg0: i32, %arg1: i32) -> (i32, i32, i32) {
    %c0_i32 = arith.constant 0 : i32
    %c0_i32_0 = arith.constant 0 : i32
    return %arg0, %c0_i32, %arg1 : i32, i32, i32
  }
}

</mosaic_0001>

<llo_original>
// kernel: tpu_custom_call.1
$region0: #{tpu_custom_call.1}
  #allocation0 [shape = 'u32[]', space=smem, size = 0x4, offset = 0x4, fixed_abs, tag = 'smem constant byte address 0x4 - core index']
  #allocation1 [shape = 'u32[144,128]{1,0:T(1,128)}', space=vmem, size = 0x12000, scoped, tag = 'internal scratch']
  #allocation2 [shape = 'f32[6,2,256]{2,1,0:T(2,128)}', space=vmem, size = 0x3000, scoped, tag = 'scratch operand']
  %s0 = inlined_call_operand.vmem [shape: f32[2,4,256], index: 0, kind: input, shape index: {}]
  %s1 = inlined_call_operand.vmem [shape: f32[4,1], index: 1, kind: input, shape index: {}]
  %s2 = inlined_call_operand.vmem [shape: f32[4,1], index: 2, kind: input, shape index: {}]
  %s3 = inlined_call_operand.vmem [shape: f32[12,4], index: 3, kind: input, shape index: {}]
  %s4 = inlined_call_operand.vmem [shape: f32[12,1], index: 4, kind: input, shape index: {}]
  %s5 = inlined_call_operand.vmem [shape: f32[4,4], index: 5, kind: input, shape index: {}]
  %s6 = inlined_call_operand.vmem [shape: f32[4,1], index: 6, kind: input, shape index: {}]
  %s7 = inlined_call_operand.vmem [shape: f32[4,1], index: 7, kind: input, shape index: {}]
  %s8 = inlined_call_operand.vmem [shape: f32[4,1], index: 8, kind: input, shape index: {}]
  %s9 = inlined_call_operand.vmem [shape: f32[4,4], index: 9, kind: input, shape index: {}]
  %s10 = inlined_call_operand.vmem [shape: f32[4,1], index: 10, kind: input, shape index: {}]
  %s11 = inlined_call_operand.vmem [shape: f32[4,4], index: 11, kind: input, shape index: {}]
  %s12 = inlined_call_operand.vmem [shape: f32[4,1], index: 12, kind: input, shape index: {}]
  %s13 = inlined_call_operand.hbm [shape: f32[2,4,256], index: 13, kind: output, shape index: {}]
  %s14 = sld [smem:[#allocation0]]
  $region89: #{tpu_custom_call.1} parent=0
    _
  %s16 = ssub.s32 1, %s14
  %s17 = scalar_select 0, %s16, %s14
  $region1: #{tpu_custom_call.1} parent=0
    #allocation3 [shape = 'u8[4096]{0}', space=vmem, size = 0x1000, scoped, tag = 'output window, operand 0']
    #allocation4 [shape = 's32[2]{0}', space=sflag, size = 0x8, scoped, tag = 'scoped memory for tpu_custom_call.1']
    %18 = vsyncpa [#allocation4], 0
    %s19 = scalar_lea.sflag [#allocation4], 1
    %20 = vsyncpa %s19, 0
    loop: start=0, step=1, limit=6
    $region2: #{tpu_custom_call.1} parent=1 // loop_pre_header
      _
    $region3: #{tpu_custom_call.1} parent=1 // loop_header
      %s22 = sphi 0, %s26
      %p23 = scmp.ge.s32.totalorder %s22, 6
      %s29 = sphi 0, %s41
      %s30 = sphi 0, %s37
      %s31 = sphi 0, %s29
      %s32 = sphi 0, %s30
      %s33 = sphi 0, %s31
      %s34 = sphi 0, %s32
      %s44 = sphi 0, %s46
      %s47 = sphi 0, %s44
      %s48 = sphi 0, %s47
      %s64 = sphi 0, %s48
      %s68 = sphi 0, %s68
      %s70 = sphi 0, %s68
      %s71 = sphi 0, %s70
      %s85 = sphi 0, %s71
      %s89 = sphi 0, %s89
      %s91 = sphi 0, %s89
      %s92 = sphi 0, %s91
      %s106 = sphi 0, %s92
      %s110 = sphi 0, %s110
      %s112 = sphi 0, %s110
      %s113 = sphi 0, %s112
      %s127 = sphi 0, %s113
      %s131 = sphi 0, %s131
      %s133 = sphi 0, %s131
      %s134 = sphi 0, %s133
      %s148 = sphi 0, %s134
      %s152 = sphi 0, %s152
      %s154 = sphi 0, %s152
      %s155 = sphi 0, %s154
      %s169 = sphi 0, %s155
      %s173 = sphi 0, %s173
      %s175 = sphi 0, %s173
      %s176 = sphi 0, %s175
      %s190 = sphi 0, %s176
      %s194 = sphi 0, %s194
      %s196 = sphi 0, %s194
      %s197 = sphi 0, %s196
      %s211 = sphi 0, %s197
      %s215 = sphi 0, %s215
      %s217 = sphi 0, %s215
      %s218 = sphi 0, %s217
      %s232 = sphi 0, %s218
      %s236 = sphi 0, %s236
      %s238 = sphi 0, %s236
      %s239 = sphi 0, %s238
      %s253 = sphi 0, %s239
      %s257 = sphi 0, %s257
      %s259 = sphi 0, %s257
      %s260 = sphi 0, %s259
      %s274 = sphi 0, %s260
      %s278 = sphi 0, %s278
      %s280 = sphi 0, %s278
      %s281 = sphi 0, %s280
      %s295 = sphi 0, %s281
      %s299 = sphi 0, %s299
      %s301 = sphi 0, %s299
      %s302 = sphi 0, %s301
      %s316 = sphi 0, %s302
      %s324 = sphi 0, %s326
      %s327 = sphi 0, %s324
      %s328 = sphi 0, %s327
      %s344 = sphi 0, %s328
    $region4: #{tpu_custom_call.1} parent=1 // loop_header_branch
      %25 = sbr.rel (%p23) target = $region8
    $region5: #{tpu_custom_call.1} parent=1 // loop_body
      %s27 = ssub.s32 %s22, 1
      %s28 = ssub.s32 %s22, 2
      %s35 = sadd.s32 1, %s30
      %p36 = scmp.ge.s32.totalorder %s35, 2
      %s37 = scalar_select %p36, 0, %s35
      %s38 = sadd.s32 1, %s29
      %s39 = scalar_select %p36, %s38, %s29
      %p40 = scmp.ge.s32.totalorder %s39, 2
      %s41 = scalar_select %p40, 0, %s39
      %s42 = ssub.s32 %s29, %s41
      %p43 = scmp.eq.s32.totalorder %s42, 0
      %s45 = sadd.s32 %s44, 1
      %s46 = scalar_select %p43, %s44, %s45
      %p49 = pneg %p43
      %p50 = scmp.eq.s32.totalorder %s22, 3
      %p51 = por %p49, %p50
      %p52 = scmp.ne.s32.totalorder %s44, %s47
      %p53 = scmp.eq.s32.totalorder %s22, 0
      %p54 = por %p52, %p53
      %p55 = scmp.ne.s32.totalorder %s44, %s47
      %p56 = scmp.eq.s32.totalorder %s27, 3
      %p57 = por %p55, %p56
      %p58 = scmp.ne.s32.totalorder %s47, %s48
      %p59 = scmp.eq.s32.totalorder %s27, 0
      %p60 = por %p58, %p59
      %p61 = scmp.ne.s32.totalorder %s47, %s48
      %p62 = scmp.eq.s32.totalorder %s28, 3
      %p63 = por %p61, %p62
      %p65 = scmp.ne.s32.totalorder %s48, %s64
      %p66 = scmp.eq.s32.totalorder %s28, 0
      %p67 = por %p65, %p66
      %s69 = sadd.s32 %s68, 1
      %p72 = scmp.eq.s32.totalorder %s22, 3
      %p73 = scmp.ne.s32.totalorder %s68, %s70
      %p74 = scmp.eq.s32.totalorder %s22, 0
      %p75 = por %p73, %p74
      %p76 = scmp.ne.s32.totalorder %s68, %s70
      %p77 = scmp.eq.s32.totalorder %s27, 3
      %p78 = por %p76, %p77
      %p79 = scmp.ne.s32.totalorder %s70, %s71
      %p80 = scmp.eq.s32.totalorder %s27, 0
      %p81 = por %p79, %p80
      %p82 = scmp.ne.s32.totalorder %s70, %s71
      %p83 = scmp.eq.s32.totalorder %s28, 3
      %p84 = por %p82, %p83
      %p86 = scmp.ne.s32.totalorder %s71, %s85
      %p87 = scmp.eq.s32.totalorder %s28, 0
      %p88 = por %p86, %p87
      %s90 = sadd.s32 %s89, 1
      %p93 = scmp.eq.s32.totalorder %s22, 3
      %p94 = scmp.ne.s32.totalorder %s89, %s91
      %p95 = scmp.eq.s32.totalorder %s22, 0
      %p96 = por %p94, %p95
      %p97 = scmp.ne.s32.totalorder %s89, %s91
      %p98 = scmp.eq.s32.totalorder %s27, 3
      %p99 = por %p97, %p98
      %p100 = scmp.ne.s32.totalorder %s91, %s92
      %p101 = scmp.eq.s32.totalorder %s27, 0
      %p102 = por %p100, %p101
      %p103 = scmp.ne.s32.totalorder %s91, %s92
      %p104 = scmp.eq.s32.totalorder %s28, 3
      %p105 = por %p103, %p104
      %p107 = scmp.ne.s32.totalorder %s92, %s106
      %p108 = scmp.eq.s32.totalorder %s28, 0
      %p109 = por %p107, %p108
      %s111 = sadd.s32 %s110, 1
      %p114 = scmp.eq.s32.totalorder %s22, 3
      %p115 = scmp.ne.s32.totalorder %s110, %s112
      %p116 = scmp.eq.s32.totalorder %s22, 0
      %p117 = por %p115, %p116
      %p118 = scmp.ne.s32.totalorder %s110, %s112
      %p119 = scmp.eq.s32.totalorder %s27, 3
      %p120 = por %p118, %p119
      %p121 = scmp.ne.s32.totalorder %s112, %s113
      %p122 = scmp.eq.s32.totalorder %s27, 0
      %p123 = por %p121, %p122
      %p124 = scmp.ne.s32.totalorder %s112, %s113
      %p125 = scmp.eq.s32.totalorder %s28, 3
      %p126 = por %p124, %p125
      %p128 = scmp.ne.s32.totalorder %s113, %s127
      %p129 = scmp.eq.s32.totalorder %s28, 0
      %p130 = por %p128, %p129
      %s132 = sadd.s32 %s131, 1
      %p135 = scmp.eq.s32.totalorder %s22, 3
      %p136 = scmp.ne.s32.totalorder %s131, %s133
      %p137 = scmp.eq.s32.totalorder %s22, 0
      %p138 = por %p136, %p137
      %p139 = scmp.ne.s32.totalorder %s131, %s133
      %p140 = scmp.eq.s32.totalorder %s27, 3
      %p141 = por %p139, %p140
      %p142 = scmp.ne.s32.totalorder %s133, %s134
      %p143 = scmp.eq.s32.totalorder %s27, 0
      %p144 = por %p142, %p143
      %p145 = scmp.ne.s32.totalorder %s133, %s134
      %p146 = scmp.eq.s32.totalorder %s28, 3
      %p147 = por %p145, %p146
      %p149 = scmp.ne.s32.totalorder %s134, %s148
      %p150 = scmp.eq.s32.totalorder %s28, 0
      %p151 = por %p149, %p150
      %s153 = sadd.s32 %s152, 1
      %p156 = scmp.eq.s32.totalorder %s22, 3
      %p157 = scmp.ne.s32.totalorder %s152, %s154
      %p158 = scmp.eq.s32.totalorder %s22, 0
      %p159 = por %p157, %p158
      %p160 = scmp.ne.s32.totalorder %s152, %s154
      %p161 = scmp.eq.s32.totalorder %s27, 3
      %p162 = por %p160, %p161
      %p163 = scmp.ne.s32.totalorder %s154, %s155
      %p164 = scmp.eq.s32.totalorder %s27, 0
      %p165 = por %p163, %p164
      %p166 = scmp.ne.s32.totalorder %s154, %s155
      %p167 = scmp.eq.s32.totalorder %s28, 3
      %p168 = por %p166, %p167
      %p170 = scmp.ne.s32.totalorder %s155, %s169
      %p171 = scmp.eq.s32.totalorder %s28, 0
      %p172 = por %p170, %p171
      %s174 = sadd.s32 %s173, 1
      %p177 = scmp.eq.s32.totalorder %s22, 3
      %p178 = scmp.ne.s32.totalorder %s173, %s175
      %p179 = scmp.eq.s32.totalorder %s22, 0
      %p180 = por %p178, %p179
      %p181 = scmp.ne.s32.totalorder %s173, %s175
      %p182 = scmp.eq.s32.totalorder %s27, 3
      %p183 = por %p181, %p182
      %p184 = scmp.ne.s32.totalorder %s175, %s176
      %p185 = scmp.eq.s32.totalorder %s27, 0
      %p186 = por %p184, %p185
      %p187 = scmp.ne.s32.totalorder %s175, %s176
      %p188 = scmp.eq.s32.totalorder %s28, 3
      %p189 = por %p187, %p188
      %p191 = scmp.ne.s32.totalorder %s176, %s190
      %p192 = scmp.eq.s32.totalorder %s28, 0
      %p193 = por %p191, %p192
      %s195 = sadd.s32 %s194, 1
      %p198 = scmp.eq.s32.totalorder %s22, 3
      %p199 = scmp.ne.s32.totalorder %s194, %s196
      %p200 = scmp.eq.s32.totalorder %s22, 0
      %p201 = por %p199, %p200
      %p202 = scmp.ne.s32.totalorder %s194, %s196
      %p203 = scmp.eq.s32.totalorder %s27, 3
      %p204 = por %p202, %p203
      %p205 = scmp.ne.s32.totalorder %s196, %s197
      %p206 = scmp.eq.s32.totalorder %s27, 0
      %p207 = por %p205, %p206
      %p208 = scmp.ne.s32.totalorder %s196, %s197
      %p209 = scmp.eq.s32.totalorder %s28, 3
      %p210 = por %p208, %p209
      %p212 = scmp.ne.s32.totalorder %s197, %s211
      %p213 = scmp.eq.s32.totalorder %s28, 0
      %p214 = por %p212, %p213
      %s216 = sadd.s32 %s215, 1
      %p219 = scmp.eq.s32.totalorder %s22, 3
      %p220 = scmp.ne.s32.totalorder %s215, %s217
      %p221 = scmp.eq.s32.totalorder %s22, 0
      %p222 = por %p220, %p221
      %p223 = scmp.ne.s32.totalorder %s215, %s217
      %p224 = scmp.eq.s32.totalorder %s27, 3
      %p225 = por %p223, %p224
      %p226 = scmp.ne.s32.totalorder %s217, %s218
      %p227 = scmp.eq.s32.totalorder %s27, 0
      %p228 = por %p226, %p227
      %p229 = scmp.ne.s32.totalorder %s217, %s218
      %p230 = scmp.eq.s32.totalorder %s28, 3
      %p231 = por %p229, %p230
      %p233 = scmp.ne.s32.totalorder %s218, %s232
      %p234 = scmp.eq.s32.totalorder %s28, 0
      %p235 = por %p233, %p234
      %s237 = sadd.s32 %s236, 1
      %p240 = scmp.eq.s32.totalorder %s22, 3
      %p241 = scmp.ne.s32.totalorder %s236, %s238
      %p242 = scmp.eq.s32.totalorder %s22, 0
      %p243 = por %p241, %p242
      %p244 = scmp.ne.s32.totalorder %s236, %s238
      %p245 = scmp.eq.s32.totalorder %s27, 3
      %p246 = por %p244, %p245
      %p247 = scmp.ne.s32.totalorder %s238, %s239
      %p248 = scmp.eq.s32.totalorder %s27, 0
      %p249 = por %p247, %p248
      %p250 = scmp.ne.s32.totalorder %s238, %s239
      %p251 = scmp.eq.s32.totalorder %s28, 3
      %p252 = por %p250, %p251
      %p254 = scmp.ne.s32.totalorder %s239, %s253
      %p255 = scmp.eq.s32.totalorder %s28, 0
      %p256 = por %p254, %p255
      %s258 = sadd.s32 %s257, 1
      %p261 = scmp.eq.s32.totalorder %s22, 3
      %p262 = scmp.ne.s32.totalorder %s257, %s259
      %p263 = scmp.eq.s32.totalorder %s22, 0
      %p264 = por %p262, %p263
      %p265 = scmp.ne.s32.totalorder %s257, %s259
      %p266 = scmp.eq.s32.totalorder %s27, 3
      %p267 = por %p265, %p266
      %p268 = scmp.ne.s32.totalorder %s259, %s260
      %p269 = scmp.eq.s32.totalorder %s27, 0
      %p270 = por %p268, %p269
      %p271 = scmp.ne.s32.totalorder %s259, %s260
      %p272 = scmp.eq.s32.totalorder %s28, 3
      %p273 = por %p271, %p272
      %p275 = scmp.ne.s32.totalorder %s260, %s274
      %p276 = scmp.eq.s32.totalorder %s28, 0
      %p277 = por %p275, %p276
      %s279 = sadd.s32 %s278, 1
      %p282 = scmp.eq.s32.totalorder %s22, 3
      %p283 = scmp.ne.s32.totalorder %s278, %s280
      %p284 = scmp.eq.s32.totalorder %s22, 0
      %p285 = por %p283, %p284
      %p286 = scmp.ne.s32.totalorder %s278, %s280
      %p287 = scmp.eq.s32.totalorder %s27, 3
      %p288 = por %p286, %p287
      %p289 = scmp.ne.s32.totalorder %s280, %s281
      %p290 = scmp.eq.s32.totalorder %s27, 0
      %p291 = por %p289, %p290
      %p292 = scmp.ne.s32.totalorder %s280, %s281
      %p293 = scmp.eq.s32.totalorder %s28, 3
      %p294 = por %p292, %p293
      %p296 = scmp.ne.s32.totalorder %s281, %s295
      %p297 = scmp.eq.s32.totalorder %s28, 0
      %p298 = por %p296, %p297
      %s300 = sadd.s32 %s299, 1
      %p303 = scmp.eq.s32.totalorder %s22, 3
      %p304 = scmp.ne.s32.totalorder %s299, %s301
      %p305 = scmp.eq.s32.totalorder %s22, 0
      %p306 = por %p304, %p305
      %p307 = scmp.ne.s32.totalorder %s299, %s301
      %p308 = scmp.eq.s32.totalorder %s27, 3
      %p309 = por %p307, %p308
      %p310 = scmp.ne.s32.totalorder %s301, %s302
      %p311 = scmp.eq.s32.totalorder %s27, 0
      %p312 = por %p310, %p311
      %p313 = scmp.ne.s32.totalorder %s301, %s302
      %p314 = scmp.eq.s32.totalorder %s28, 3
      %p315 = por %p313, %p314
      %p317 = scmp.ne.s32.totalorder %s302, %s316
      %p318 = scmp.eq.s32.totalorder %s28, 0
      %p319 = por %p317, %p318
      %s320 = ssub.s32 %s29, %s41
      %s321 = ssub.s32 %s30, %s37
      %s322 = sor.u32 %s320, %s321
      %p323 = scmp.eq.s32.totalorder %s322, 0
      %s325 = sadd.s32 %s324, 1
      %s326 = scalar_select %p323, %s324, %s325
      %p329 = pneg %p323
      %p330 = scmp.eq.s32.totalorder %s22, 3
      %p331 = por %p329, %p330
      %p332 = scmp.ne.s32.totalorder %s324, %s327
      %p333 = scmp.eq.s32.totalorder %s22, 0
      %p334 = por %p332, %p333
      %p335 = scmp.ne.s32.totalorder %s324, %s327
      %p336 = scmp.eq.s32.totalorder %s27, 3
      %p337 = por %p335, %p336
      %p338 = scmp.ne.s32.totalorder %s327, %s328
      %p339 = scmp.eq.s32.totalorder %s27, 0
      %p340 = por %p338, %p339
      %p341 = scmp.ne.s32.totalorder %s327, %s328
      %p342 = scmp.eq.s32.totalorder %s28, 3
      %p343 = por %p341, %p342
      %p345 = scmp.ne.s32.totalorder %s328, %s344
      %p346 = scmp.eq.s32.totalorder %s28, 0
      %p347 = por %p345, %p346
      %p348 = scmp.le.s32.totalorder 1, %s22
      %p349 = scmp.lt.s32.totalorder %s22, 5
      %p350 = pnand %p348, %p349
      %p351 = pneg %p350
      // Predicated region
      $region9: #{tpu_custom_call.1} parent=5 // pred_check
        _
      $region10: #{tpu_custom_call.1} parent=5 // pred_check_branch
        %353 = sbr.rel (%p350) target = $region12
      $region11: #{tpu_custom_call.1} parent=5 // pred_region
        %s354 = ssub.s32 %s22, 1
        // Predicated region
        $region13: #{tpu_custom_call.1} parent=11 // pred_check
          %p355 = pneg %p81
        $region14: #{tpu_custom_call.1} parent=11 // pred_check_branch
          %357 = sbr.rel (%p355) target = $region16
        $region15: #{tpu_custom_call.1} parent=11 // pred_region
          _
        $region16: #{tpu_custom_call.1} parent=11 // pred_fallthru
          _
        // Predicated region
        $region17: #{tpu_custom_call.1} parent=11 // pred_check
          %p358 = pneg %p102
        $region18: #{tpu_custom_call.1} parent=11 // pred_check_branch
          %360 = sbr.rel (%p358) target = $region20
        $region19: #{tpu_custom_call.1} parent=11 // pred_region
          _
        $region20: #{tpu_custom_call.1} parent=11 // pred_fallthru
          _
        // Predicated region
        $region21: #{tpu_custom_call.1} parent=11 // pred_check
          %p361 = pneg %p123
        $region22: #{tpu_custom_call.1} parent=11 // pred_check_branch
          %363 = sbr.rel (%p361) target = $region24
        $region23: #{tpu_custom_call.1} parent=11 // pred_region
          _
        $region24: #{tpu_custom_call.1} parent=11 // pred_fallthru
          _
        // Predicated region
        $region25: #{tpu_custom_call.1} parent=11 // pred_check
          %p364 = pneg %p144
        $region26: #{tpu_custom_call.1} parent=11 // pred_check_branch
          %366 = sbr.rel (%p364) target = $region28
        $region27: #{tpu_custom_call.1} parent=11 // pred_region
          _
        $region28: #{tpu_custom_call.1} parent=11 // pred_fallthru
          _
        // Predicated region
        $region29: #{tpu_custom_call.1} parent=11 // pred_check
          %p367 = pneg %p165
        $region30: #{tpu_custom_call.1} parent=11 // pred_check_branch
          %369 = sbr.rel (%p367) target = $region32
        $region31: #{tpu_custom_call.1} parent=11 // pred_region
          _
        $region32: #{tpu_custom_call.1} parent=11 // pred_fallthru
          _
        // Predicated region
        $region33: #{tpu_custom_call.1} parent=11 // pred_check
          %p370 = pneg %p186
        $region34: #{tpu_custom_call.1} parent=11 // pred_check_branch
          %372 = sbr.rel (%p370) target = $region36
        $region35: #{tpu_custom_call.1} parent=11 // pred_region
          _
        $region36: #{tpu_custom_call.1} parent=11 // pred_fallthru
          _
        // Predicated region
        $region37: #{tpu_custom_call.1} parent=11 // pred_check
          %p373 = pneg %p207
        $region38: #{tpu_custom_call.1} parent=11 // pred_check_branch
          %375 = sbr.rel (%p373) target = $region40
        $region39: #{tpu_custom_call.1} parent=11 // pred_region
          _
        $region40: #{tpu_custom_call.1} parent=11 // pred_fallthru
          _
        // Predicated region
        $region41: #{tpu_custom_call.1} parent=11 // pred_check
          %p376 = pneg %p228
        $region42: #{tpu_custom_call.1} parent=11 // pred_check_branch
          %378 = sbr.rel (%p376) target = $region44
        $region43: #{tpu_custom_call.1} parent=11 // pred_region
          _
        $region44: #{tpu_custom_call.1} parent=11 // pred_fallthru
          _
        // Predicated region
        $region45: #{tpu_custom_call.1} parent=11 // pred_check
          %p379 = pneg %p249
        $region46: #{tpu_custom_call.1} parent=11 // pred_check_branch
          %381 = sbr.rel (%p379) target = $region48
        $region47: #{tpu_custom_call.1} parent=11 // pred_region
          _
        $region48: #{tpu_custom_call.1} parent=11 // pred_fallthru
          _
        // Predicated region
        $region49: #{tpu_custom_call.1} parent=11 // pred_check
          %p382 = pneg %p270
        $region50: #{tpu_custom_call.1} parent=11 // pred_check_branch
          %384 = sbr.rel (%p382) target = $region52
        $region51: #{tpu_custom_call.1} parent=11 // pred_region
          _
        $region52: #{tpu_custom_call.1} parent=11 // pred_fallthru
          _
        // Predicated region
        $region53: #{tpu_custom_call.1} parent=11 // pred_check
          %p385 = pneg %p291
        $region54: #{tpu_custom_call.1} parent=11 // pred_check_branch
          %387 = sbr.rel (%p385) target = $region56
        $region55: #{tpu_custom_call.1} parent=11 // pred_region
          _
        $region56: #{tpu_custom_call.1} parent=11 // pred_fallthru
          _
        // Predicated region
        $region57: #{tpu_custom_call.1} parent=11 // pred_check
          %p388 = pneg %p312
        $region58: #{tpu_custom_call.1} parent=11 // pred_check_branch
          %390 = sbr.rel (%p388) target = $region60
        $region59: #{tpu_custom_call.1} parent=11 // pred_region
          _
        $region60: #{tpu_custom_call.1} parent=11 // pred_fallthru
          _
      $region12: #{tpu_custom_call.1} parent=5 // pred_fallthru
        _
      %p391 = scmp.lt.s32.totalorder %s22, 4
      // Predicated region
      $region61: #{tpu_custom_call.1} parent=5 // pred_check
        %p392 = pneg %p391
      $region62: #{tpu_custom_call.1} parent=5 // pred_check_branch
        %394 = sbr.rel (%p392) target = $region64
      $region63: #{tpu_custom_call.1} parent=5 // pred_region
        // Predicated region
        $region65: #{tpu_custom_call.1} parent=63 // pred_check
          %p395 = pneg %p54
        $region66: #{tpu_custom_call.1} parent=63 // pred_check_branch
          %397 = sbr.rel (%p395) target = $region68
        $region67: #{tpu_custom_call.1} parent=63 // pred_region
          %p398 = scmp.lt.s32.totalorder %s29, 1
          %s399 = scalar_select %p398, %s29, 1
          %s400 = smul.addr %s399, 2
          %s401 = smul.addr %s400, 4
          %s402 = scalar_lea.vmem %s0, %s401
        $region68: #{tpu_custom_call.1} parent=63 // pred_fallthru
          _
      $region64: #{tpu_custom_call.1} parent=5 // pred_fallthru
        _
      %p403 = scmp.le.s32.totalorder 1, %s22
      %p404 = scmp.lt.s32.totalorder %s22, 5
      %p405 = pnand %p403, %p404
      %p406 = pneg %p405
      // Predicated region
      $region69: #{tpu_custom_call.1} parent=5 // pred_check
        _
      $region70: #{tpu_custom_call.1} parent=5 // pred_check_branch
        %408 = sbr.rel (%p405) target = $region72
      $region71: #{tpu_custom_call.1} parent=5 // pred_region
        %s409 = ssub.s32 %s22, 1
        %p410 = scmp.lt.s32.totalorder %s31, 1
        %s411 = scalar_select %p410, %s31, 1
        %s412 = smul.addr %s411, 2
        %s413 = smul.addr %s412, 4
        %s414 = scalar_lea.vmem %s0, %s413
        %p415 = pneg %p60
        %p416 = pneg %p57
        %p417 = pneg %p81
        %p418 = pneg %p78
        %p419 = pneg %p102
        %p420 = pneg %p99
        %p421 = pneg %p123
        %p422 = pneg %p120
        %p423 = pneg %p144
        %p424 = pneg %p141
        %p425 = pneg %p165
        %p426 = pneg %p162
        %p427 = pneg %p186
        %p428 = pneg %p183
        %p429 = pneg %p207
        %p430 = pneg %p204
        %p431 = pneg %p228
        %p432 = pneg %p225
        %p433 = pneg %p249
        %p434 = pneg %p246
        %p435 = pneg %p270
        %p436 = pneg %p267
        %p437 = pneg %p291
        %p438 = pneg %p288
        %p439 = pneg %p312
        %p440 = pneg %p309
        %p441 = pneg %p340
        %p442 = pneg %p337
        %s443 = sand.u32 %s327, 1
        %s444 = scalar_lea.sflag [#allocation4], %s443
        %s445 = sand.u32 %s327, 1
        %s446 = smul.addr %s445, 4
        %s447 = scalar_lea.vmem [#allocation3], %s446
        %p448 = scmp.lt.s32.totalorder %s31, 1
        %s449 = scalar_select %p448, %s31, 1
        %s450 = smul.addr %s449, 2
        %s451 = smul.addr %s450, 4
        %s452 = scalar_lea.vmem %s0, %s451
        %p454 = scmp.eq.s32.totalorder %s32, 0
        // Predicated region
        $region73: #{tpu_custom_call.1} parent=71 // pred_check
          %p455 = pneg %p454
        $region74: #{tpu_custom_call.1} parent=71 // pred_check_branch
          %457 = sbr.rel (%p455) target = $region76
        $region75: #{tpu_custom_call.1} parent=71 // pred_region
          %v458 = vld [vmem:[%s452] sm:$0xff]
          %v459 = vld [vmem:[%s1] sm:$0xf]
          %v460 = vld [vmem:[%s2] sm:$0xf]
          %v462 = vcombine.high %v458, %v458
          %vm464 = vcmask 1043456
          %v465 = vsel %vm464, %v458, 0.0
          %v466 = vrot.slane %v465, 4
          %v467 = vadd.f32 %v465, %v466
          %v468 = vrot.slane %v467, 2
          %v469 = vadd.f32 %v467, %v468
          %v470 = vrot.slane %v469, 1
          %v471 = vadd.f32 %v469, %v470
          %v472 = vsel %vm464, %v462, 0.0
          %v473 = vrot.slane %v472, 4
          %v474 = vadd.f32 %v472, %v473
          %v475 = vrot.slane %v474, 2
          %v476 = vadd.f32 %v474, %v475
          %v477 = vrot.slane %v476, 1
          %v478 = vadd.f32 %v476, %v477
          %v479 = vrcp.pop 4.0
          %v480 = vmul.f32 %v471, %v479
          %v481 = vmul.f32 %v478, %v479
          %v484 = vcombine.low %v480, %v481
          %v486 = vsub.f32 %v458, %v484
          %v487 = vmul.f32 %v486, %v486
          %v489 = vcombine.high %v487, %v487
          %v491 = vsel %vm464, %v487, 0.0
          %v492 = vrot.slane %v491, 4
          %v493 = vadd.f32 %v491, %v492
          %v494 = vrot.slane %v493, 2
          %v495 = vadd.f32 %v493, %v494
          %v496 = vrot.slane %v495, 1
          %v497 = vadd.f32 %v495, %v496
          %v498 = vsel %vm464, %v489, 0.0
          %v499 = vrot.slane %v498, 4
          %v500 = vadd.f32 %v498, %v499
          %v501 = vrot.slane %v500, 2
          %v502 = vadd.f32 %v500, %v501
          %v503 = vrot.slane %v502, 1
          %v504 = vadd.f32 %v502, %v503
          %v505 = vmul.f32 %v497, %v479
          %v506 = vmul.f32 %v504, %v479
          %v507 = vadd.f32 %v505, 1e-05
          %v508 = vadd.f32 %v506, 1e-05
          %v509 = vrsqrt.pop %v507
          %v510 = vrsqrt.pop %v508
          %v513 = vcombine.low %v509, %v510
          %v515 = vmul.f32 %v486, %v513
          %517 = vset.pattern.permute.xlu0 0
          %518 = vperm.xlu0 %517, %v459
          %v519 = vpop.permute.xlu0 %518
          %v521 = vunpack.c.l.s4 839922192
          %v522 = vunpack.c.0.s8 %v521
          %v523 = vlaneseq
          %v524 = vshrl.u32 %v523, 7
          %v525 = vsub.s32 %v522, %v524
          %v526 = vrot.slane %v519, %v525
          %v528 = vmul.f32 %v515, %v526
          %530 = vset.pattern.permute.xlu0 0
          %531 = vperm.xlu0 %530, %v460
          %v532 = vpop.permute.xlu0 %531
          %v534 = vunpack.c.l.s4 839922192
          %v535 = vunpack.c.0.s8 %v534
          %v536 = vlaneseq
          %v537 = vshrl.u32 %v536, 7
          %v538 = vsub.s32 %v535, %v537
          %v539 = vrot.slane %v532, %v538
          %v541 = vadd.f32 %v528, %v539
          %v542 = vld [vmem:[%s3] sm:$0xff]
          %v543 = vld [vmem:[%s3 + $0x8] sm:$0xf]
          %v544 = vld [vmem:[%s4] sm:$0xff]
          %v545 = vld [vmem:[%s4 + $0x8] sm:$0xf]
          %547 = vset.pattern.permute.xlu0 0
          %548 = vperm.xlu0 %547, %v544
          %v549 = vpop.permute.xlu0 %548
          %552 = vset.pattern.permute.xlu0 0
          %553 = vperm.xlu0 %552, %v545
          %v554 = vpop.permute.xlu0 %553
          %v557 = vcombine.high %v541, %v541
          %vm558 = vcmask 31744
          %v560 = vsel %vm558, %v542, 0
          %v563 = vsel %vm558, %v543, 0
          %v565 = vsel %vm464, %v541, 0
          %v567 = vsel %vm464, %v557, 0
          %569 = vmatprep.subr.mxu0 0.0
          %570 = vmatpush1.msra.mxu0 0.0
          %571 = vmatprep.subr.mxu0 0.0
          %572 = vmatpush1.msra.mxu0 0.0
          %573 = vmatprep.subr.mxu0 0.0
          %574 = vmatpush1.msra.mxu0 0.0
          %575 = vmatprep.subr.mxu0 0.0
          %576 = vmatpush1.msra.mxu0 0.0
          %577 = vmatprep.subr.mxu0 0.0
          %578 = vmatpush1.msra.mxu0 0.0
          %579 = vmatprep.subr.mxu0 0.0
          %580 = vmatpush1.msra.mxu0 0.0
          %581 = vmatprep.subr.mxu0 0.0
          %582 = vmatpush1.msra.mxu0 0.0
          %583 = vmatprep.subr.mxu0 0.0
          %584 = vmatpush1.msra.mxu0 0.0
          %585 = vmatprep.subr.mxu0 0.0
          %586 = vmatpush1.msra.mxu0 0.0
          %587 = vmatprep.subr.mxu0 0.0
          %588 = vmatpush1.msra.mxu0 0.0
          %589 = vmatprep.subr.mxu0 0.0
          %590 = vmatpush1.msra.mxu0 0.0
          %591 = vmatprep.subr.mxu0 0.0
          %592 = vmatpush1.msra.mxu0 0.0
          %593 = vmatprep.subr.mxu0 0.0
          %594 = vmatpush1.msra.mxu0 0.0
          %595 = vmatprep.subr.mxu0 0.0
          %596 = vmatpush1.msra.mxu0 0.0
          %597 = vmatprep.subr.mxu0 0.0
          %598 = vmatpush1.msra.mxu0 0.0
          %599 = vmatprep.subr.mxu0 %v567
          %600 = vmatpush1.msra.mxu0 %v565
          %601 = vmatprep.subr.mxu0 0.0
          %602 = vmatpush2.msra.mxu0 0.0
          %603 = vmatprep.subr.mxu0 0.0
          %604 = vmatpush2.msra.mxu0 0.0
          %605 = vmatprep.subr.mxu0 0.0
          %606 = vmatpush2.msra.mxu0 0.0
          %607 = vmatprep.subr.mxu0 0.0
          %608 = vmatpush2.msra.mxu0 0.0
          %609 = vmatprep.subr.mxu0 0.0
          %610 = vmatpush2.msra.mxu0 0.0
          %611 = vmatprep.subr.mxu0 0.0
          %612 = vmatpush2.msra.mxu0 0.0
          %613 = vmatprep.subr.mxu0 0.0
          %614 = vmatpush2.msra.mxu0 0.0
          %615 = vmatprep.subr.mxu0 0.0
          %616 = vmatpush2.msra.mxu0 0.0
          %617 = vmatprep.subr.mxu0 0.0
          %618 = vmatpush2.msra.mxu0 0.0
          %619 = vmatprep.subr.mxu0 0.0
          %620 = vmatpush2.msra.mxu0 0.0
          %621 = vmatprep.subr.mxu0 0.0
          %622 = vmatpush2.msra.mxu0 0.0
          %623 = vmatprep.subr.mxu0 0.0
          %624 = vmatpush2.msra.mxu0 0.0
          %625 = vmatprep.subr.mxu0 0.0
          %626 = vmatpush2.msra.mxu0 0.0
          %627 = vmatprep.subr.mxu0 0.0
          %628 = vmatpush2.msra.mxu0 0.0
          %629 = vmatprep.subr.mxu0 0.0
          %630 = vmatpush2.msra.mxu0 0.0
          %631 = vmatprep.subr.mxu0 0.0
          %632 = vmatpush2.msra.mxu0 0.0
          %633 = vmatprep.mubr.f32.mxu0 0.0
          %634 = vmatmul.mubr.f32.gmra.mxu0 %v560
          %v635 = vpop.f32.mrf.mxu0
          %v636 = vadd.f32 %v549, %v635
          %v637 = vpop.f32.mrf.mxu0
          %v638 = vadd.f32 %v549, %v637
          %639 = vmatprep.mubr.f32.mxu0 0.0
          %640 = vmatmul.mubr.f32.gmra.mxu0 %v563
          %v641 = vpop.f32.mrf.mxu0
          %v642 = vadd.f32 %v554, %v641
          %v643 = vpop.f32.mrf.mxu0
          %v644 = vadd.f32 %v554, %v643
          %645 = vdwg.mxu0
          %v648 = vcombine.low %v636, %v638
          %v650 = vunpack.c.l.s4 1983009808
          %v651 = vunpack.c.0.s8 %v650
          %v652 = vlaneseq
          %v653 = vshrl.u32 %v652, 7
          %v654 = vsub.s32 %v651, %v653
          %v655 = vrot.slane %v648, %v654
          %657 = vst [vmem:[#allocation2] sm:$0xf] %v655
          %v658 = vcombine.high %v655, %v655
          %s660 = scalar_lea.vmem [#allocation2], 4
          %661 = vst [vmem:[%s660] sm:$0xf] %v658
          %v662 = vcombine.high %v636, %v638
          %v664 = vunpack.c.l.s4 1983009808
          %v665 = vunpack.c.0.s8 %v664
          %v666 = vlaneseq
          %v667 = vshrl.u32 %v666, 7
          %v668 = vsub.s32 %v665, %v667
          %v669 = vrot.slane %v662, %v668
          %s671 = scalar_lea.vmem [#allocation2], 8
          %672 = vst [vmem:[%s671] sm:$0xf] %v669
          %v673 = vcombine.high %v669, %v669
          %s675 = scalar_lea.vmem [#allocation2], 12
          %676 = vst [vmem:[%s675] sm:$0xf] %v673
          %v679 = vcombine.low %v642, %v644
          %v681 = vunpack.c.l.s4 1983009808
          %v682 = vunpack.c.0.s8 %v681
          %v683 = vlaneseq
          %v684 = vshrl.u32 %v683, 7
          %v685 = vsub.s32 %v682, %v684
          %v686 = vrot.slane %v679, %v685
          %s688 = scalar_lea.vmem [#allocation2], 16
          %689 = vst [vmem:[%s688] sm:$0xf] %v686
          %v690 = vcombine.high %v686, %v686
          %s692 = scalar_lea.vmem [#allocation2], 20
          %693 = vst [vmem:[%s692] sm:$0xf] %v690
        $region76: #{tpu_custom_call.1} parent=71 // pred_fallthru
          _
        %s694 = smul.u32 %s32, 128
        %s695 = sshra.s32 %s694, 7
        %s696 = sand.u32 %s694, 127
        %s697 = smul.addr %s695, 4
        %s698 = scalar_lea.vmem %s452, %s697
        %v699 = vld [vmem:[%s698] sm:$0xf]
        %s700 = smul.addr %s695, 2
        %s701 = scalar_lea.vmem [#allocation2], %s700
        %v702 = vld [vmem:[%s701] sm:$0x3]
        %s703 = scalar_lea.vmem [#allocation2], 8
        %v704 = vld [vmem:[%s703] sm:$0xf]
        %s705 = scalar_lea.vmem [#allocation2], 16
        %v706 = vld [vmem:[%s705] sm:$0xf]
        %707 = vxpose.xlu0.b32.start [1/16] %v702, 128
        %708 = vxpose.xlu0.b32.cont [2/16] 0.0, 128
        %709 = vxpose.xlu0.b32.cont [3/16] 0.0, 128
        %710 = vxpose.xlu0.b32.cont [4/16] 0.0, 128
        %711 = vxpose.xlu0.b32.cont [5/16] 0.0, 128
        %712 = vxpose.xlu0.b32.cont [6/16] 0.0, 128
        %713 = vxpose.xlu0.b32.cont [7/16] 0.0, 128
        %714 = vxpose.xlu0.b32.cont [8/16] 0.0, 128
        %715 = vxpose.xlu0.b32.cont [9/16] 0.0, 128
        %716 = vxpose.xlu0.b32.cont [10/16] 0.0, 128
        %717 = vxpose.xlu0.b32.cont [11/16] 0.0, 128
        %718 = vxpose.xlu0.b32.cont [12/16] 0.0, 128
        %719 = vxpose.xlu0.b32.cont [13/16] 0.0, 128
        %720 = vxpose.xlu0.b32.cont [14/16] 0.0, 128
        %721 = vxpose.xlu0.b32.cont [15/16] 0.0, 128
        %722 = vxpose.xlu0.b32.end [16/16] 0.0, 128
        %v723 = vpop.trf.xlu0
        %v724 = vpop.trf.xlu0
        %v725 = vpop.trf.xlu0
        %v726 = vpop.trf.xlu0
        %v727 = vpop.trf.xlu0
        %v728 = vpop.trf.xlu0
        %v729 = vpop.trf.xlu0
        %v730 = vpop.trf.xlu0
        %v731 = vpop.trf.xlu0
        %v732 = vpop.trf.xlu0
        %v733 = vpop.trf.xlu0
        %v734 = vpop.trf.xlu0
        %v735 = vpop.trf.xlu0
        %v736 = vpop.trf.xlu0
        %v737 = vpop.trf.xlu0
        %v738 = vpop.trf.xlu0
        %v741 = vunpack.c.l.s4 1983009808
        %v742 = vunpack.c.0.s8 %v741
        %v743 = vlaneseq
        %v744 = vshrl.u32 %v743, 7
        %v745 = vsub.s32 %v742, %v744
        %v746 = vrot.slane %v704, %v745
        %v747 = vcombine.high %v746, %v746
        %vm748 = vcmask 15360
        %v750 = vsel %vm748, %v723, 0
        %v753 = vsel %vm748, %v724, 0
        %v756 = vsel %vm748, %v725, 0
        %v759 = vsel %vm748, %v726, 0
        %v762 = vsel %vm748, %v727, 0
        %v765 = vsel %vm748, %v728, 0
        %v768 = vsel %vm748, %v729, 0
        %v771 = vsel %vm748, %v730, 0
        %v774 = vsel %vm748, %v731, 0
        %v777 = vsel %vm748, %v732, 0
        %v780 = vsel %vm748, %v733, 0
        %v783 = vsel %vm748, %v734, 0
        %v786 = vsel %vm748, %v735, 0
        %v789 = vsel %vm748, %v736, 0
        %v792 = vsel %vm748, %v737, 0
        %v795 = vsel %vm748, %v738, 0
        %vm797 = vcmask 1041408
        %v798 = vsel %vm797, %v746, 0
        %v800 = vsel %vm797, %v747, 0
        %802 = vmatprep.subr.mxu0 0.0
        %803 = vmatpush1.msra.mxu0 0.0
        %804 = vmatprep.subr.mxu0 0.0
        %805 = vmatpush1.msra.mxu0 0.0
        %806 = vmatprep.subr.mxu0 0.0
        %807 = vmatpush1.msra.mxu0 0.0
        %808 = vmatprep.subr.mxu0 0.0
        %809 = vmatpush1.msra.mxu0 0.0
        %810 = vmatprep.subr.mxu0 0.0
        %811 = vmatpush1.msra.mxu0 0.0
        %812 = vmatprep.subr.mxu0 0.0
        %813 = vmatpush1.msra.mxu0 0.0
        %814 = vmatprep.subr.mxu0 0.0
        %815 = vmatpush1.msra.mxu0 0.0
        %816 = vmatprep.subr.mxu0 0.0
        %817 = vmatpush1.msra.mxu0 0.0
        %818 = vmatprep.subr.mxu0 0.0
        %819 = vmatpush1.msra.mxu0 0.0
        %820 = vmatprep.subr.mxu0 0.0
        %821 = vmatpush1.msra.mxu0 0.0
        %822 = vmatprep.subr.mxu0 0.0
        %823 = vmatpush1.msra.mxu0 0.0
        %824 = vmatprep.subr.mxu0 0.0
        %825 = vmatpush1.msra.mxu0 0.0
        %826 = vmatprep.subr.mxu0 0.0
        %827 = vmatpush1.msra.mxu0 0.0
        %828 = vmatprep.subr.mxu0 0.0
        %829 = vmatpush1.msra.mxu0 0.0
        %830 = vmatprep.subr.mxu0 0.0
        %831 = vmatpush1.msra.mxu0 0.0
        %832 = vmatprep.subr.mxu0 %v800
        %833 = vmatpush1.msra.mxu0 %v798
        %834 = vmatprep.subr.mxu0 0.0
        %835 = vmatpush2.msra.mxu0 0.0
        %836 = vmatprep.subr.mxu0 0.0
        %837 = vmatpush2.msra.mxu0 0.0
        %838 = vmatprep.subr.mxu0 0.0
        %839 = vmatpush2.msra.mxu0 0.0
        %840 = vmatprep.subr.mxu0 0.0
        %841 = vmatpush2.msra.mxu0 0.0
        %842 = vmatprep.subr.mxu0 0.0
        %843 = vmatpush2.msra.mxu0 0.0
        %844 = vmatprep.subr.mxu0 0.0
        %845 = vmatpush2.msra.mxu0 0.0
        %846 = vmatprep.subr.mxu0 0.0
        %847 = vmatpush2.msra.mxu0 0.0
        %848 = vmatprep.subr.mxu0 0.0
        %849 = vmatpush2.msra.mxu0 0.0
        %850 = vmatprep.subr.mxu0 0.0
        %851 = vmatpush2.msra.mxu0 0.0
        %852 = vmatprep.subr.mxu0 0.0
        %853 = vmatpush2.msra.mxu0 0.0
        %854 = vmatprep.subr.mxu0 0.0
        %855 = vmatpush2.msra.mxu0 0.0
        %856 = vmatprep.subr.mxu0 0.0
        %857 = vmatpush2.msra.mxu0 0.0
        %858 = vmatprep.subr.mxu0 0.0
        %859 = vmatpush2.msra.mxu0 0.0
        %860 = vmatprep.subr.mxu0 0.0
        %861 = vmatpush2.msra.mxu0 0.0
        %862 = vmatprep.subr.mxu0 0.0
        %863 = vmatpush2.msra.mxu0 0.0
        %864 = vmatprep.subr.mxu0 0.0
        %865 = vmatpush2.msra.mxu0 0.0
        %866 = vmatprep.mubr.f32.mxu0 0.0
        %867 = vmatmul.mubr.f32.gmra.mxu0 %v750
        %v868 = vpop.f32.mrf.mxu0
        %v869 = vadd.f32 0.0, %v868
        %v870 = vpop.f32.mrf.mxu0
        %v871 = vadd.f32 0.0, %v870
        %872 = vmatprep.mubr.f32.mxu0 0.0
        %873 = vmatmul.mubr.f32.gmra.mxu0 %v753
        %v874 = vpop.f32.mrf.mxu0
        %v875 = vadd.f32 0.0, %v874
        %v876 = vpop.f32.mrf.mxu0
        %v877 = vadd.f32 0.0, %v876
        %878 = vmatprep.mubr.f32.mxu0 0.0
        %879 = vmatmul.mubr.f32.gmra.mxu0 %v756
        %v880 = vpop.f32.mrf.mxu0
        %v881 = vadd.f32 0.0, %v880
        %v882 = vpop.f32.mrf.mxu0
        %v883 = vadd.f32 0.0, %v882
        %884 = vmatprep.mubr.f32.mxu0 0.0
        %885 = vmatmul.mubr.f32.gmra.mxu0 %v759
        %v886 = vpop.f32.mrf.mxu0
        %v887 = vadd.f32 0.0, %v886
        %v888 = vpop.f32.mrf.mxu0
        %v889 = vadd.f32 0.0, %v888
        %890 = vmatprep.mubr.f32.mxu0 0.0
        %891 = vmatmul.mubr.f32.gmra.mxu0 %v762
        %v892 = vpop.f32.mrf.mxu0
        %v893 = vadd.f32 0.0, %v892
        %v894 = vpop.f32.mrf.mxu0
        %v895 = vadd.f32 0.0, %v894
        %896 = vmatprep.mubr.f32.mxu0 0.0
        %897 = vmatmul.mubr.f32.gmra.mxu0 %v765
        %v898 = vpop.f32.mrf.mxu0
        %v899 = vadd.f32 0.0, %v898
        %v900 = vpop.f32.mrf.mxu0
        %v901 = vadd.f32 0.0, %v900
        %902 = vmatprep.mubr.f32.mxu0 0.0
        %903 = vmatmul.mubr.f32.gmra.mxu0 %v768
        %v904 = vpop.f32.mrf.mxu0
        %v905 = vadd.f32 0.0, %v904
        %v906 = vpop.f32.mrf.mxu0
        %v907 = vadd.f32 0.0, %v906
        %908 = vmatprep.mubr.f32.mxu0 0.0
        %909 = vmatmul.mubr.f32.gmra.mxu0 %v771
        %v910 = vpop.f32.mrf.mxu0
        %v911 = vadd.f32 0.0, %v910
        %v912 = vpop.f32.mrf.mxu0
        %v913 = vadd.f32 0.0, %v912
        %914 = vmatprep.mubr.f32.mxu0 0.0
        %915 = vmatmul.mubr.f32.gmra.mxu0 %v774
        %v916 = vpop.f32.mrf.mxu0
        %v917 = vadd.f32 0.0, %v916
        %v918 = vpop.f32.mrf.mxu0
        %v919 = vadd.f32 0.0, %v918
        %920 = vmatprep.mubr.f32.mxu0 0.0
        %921 = vmatmul.mubr.f32.gmra.mxu0 %v777
        %v922 = vpop.f32.mrf.mxu0
        %v923 = vadd.f32 0.0, %v922
        %v924 = vpop.f32.mrf.mxu0
        %v925 = vadd.f32 0.0, %v924
        %926 = vmatprep.mubr.f32.mxu0 0.0
        %927 = vmatmul.mubr.f32.gmra.mxu0 %v780
        %v928 = vpop.f32.mrf.mxu0
        %v929 = vadd.f32 0.0, %v928
        %v930 = vpop.f32.mrf.mxu0
        %v931 = vadd.f32 0.0, %v930
        %932 = vmatprep.mubr.f32.mxu0 0.0
        %933 = vmatmul.mubr.f32.gmra.mxu0 %v783
        %v934 = vpop.f32.mrf.mxu0
        %v935 = vadd.f32 0.0, %v934
        %v936 = vpop.f32.mrf.mxu0
        %v937 = vadd.f32 0.0, %v936
        %938 = vmatprep.mubr.f32.mxu0 0.0
        %939 = vmatmul.mubr.f32.gmra.mxu0 %v786
        %v940 = vpop.f32.mrf.mxu0
        %v941 = vadd.f32 0.0, %v940
        %v942 = vpop.f32.mrf.mxu0
        %v943 = vadd.f32 0.0, %v942
        %944 = vmatprep.mubr.f32.mxu0 0.0
        %945 = vmatmul.mubr.f32.gmra.mxu0 %v789
        %v946 = vpop.f32.mrf.mxu0
        %v947 = vadd.f32 0.0, %v946
        %v948 = vpop.f32.mrf.mxu0
        %v949 = vadd.f32 0.0, %v948
        %950 = vmatprep.mubr.f32.mxu0 0.0
        %951 = vmatmul.mubr.f32.gmra.mxu0 %v792
        %v952 = vpop.f32.mrf.mxu0
        %v953 = vadd.f32 0.0, %v952
        %v954 = vpop.f32.mrf.mxu0
        %v955 = vadd.f32 0.0, %v954
        %956 = vmatprep.mubr.f32.mxu0 0.0
        %957 = vmatmul.mubr.f32.gmra.mxu0 %v795
        %v958 = vpop.f32.mrf.mxu0
        %v959 = vadd.f32 0.0, %v958
        %v960 = vpop.f32.mrf.mxu0
        %v961 = vadd.f32 0.0, %v960
        %962 = vdwg.mxu0
        %v963 = vmul.f32 %v869, 0.70710677
        %v964 = vmul.f32 %v871, 0.70710677
        %v965 = vmul.f32 %v875, 0.70710677
        %v966 = vmul.f32 %v877, 0.70710677
        %v967 = vmul.f32 %v881, 0.70710677
        %v968 = vmul.f32 %v883, 0.70710677
        %v969 = vmul.f32 %v887, 0.70710677
        %v970 = vmul.f32 %v889, 0.70710677
        %v971 = vmul.f32 %v893, 0.70710677
        %v972 = vmul.f32 %v895, 0.70710677
        %v973 = vmul.f32 %v899, 0.70710677
        %v974 = vmul.f32 %v901, 0.70710677
        %v975 = vmul.f32 %v905, 0.70710677
        %v976 = vmul.f32 %v907, 0.70710677
        %v977 = vmul.f32 %v911, 0.70710677
        %v978 = vmul.f32 %v913, 0.70710677
        %v979 = vmul.f32 %v917, 0.70710677
        %v980 = vmul.f32 %v919, 0.70710677
        %v981 = vmul.f32 %v923, 0.70710677
        %v982 = vmul.f32 %v925, 0.70710677
        %v983 = vmul.f32 %v929, 0.70710677
        %v984 = vmul.f32 %v931, 0.70710677
        %v985 = vmul.f32 %v935, 0.70710677
        %v986 = vmul.f32 %v937, 0.70710677
        %v987 = vmul.f32 %v941, 0.70710677
        %v988 = vmul.f32 %v943, 0.70710677
        %v989 = vmul.f32 %v947, 0.70710677
        %v990 = vmul.f32 %v949, 0.70710677
        %v991 = vmul.f32 %v953, 0.70710677
        %v992 = vmul.f32 %v955, 0.70710677
        %v993 = vmul.f32 %v959, 0.70710677
        %v994 = vmul.f32 %v961, 0.70710677
        %v995 = vmax.f32 %v963, %v964
        %996 = vmax.xlane.f32.xlu0 %v995
        %v997 = vpop.xlane.xlu0 %996
        %v998 = vmax.f32 %v965, %v966
        %999 = vmax.xlane.f32.xlu0 %v998
        %v1000 = vpop.xlane.xlu0 %999
        %v1001 = vmax.f32 %v967, %v968
        %1002 = vmax.xlane.f32.xlu0 %v1001
        %v1003 = vpop.xlane.xlu0 %1002
        %v1004 = vmax.f32 %v969, %v970
        %1005 = vmax.xlane.f32.xlu0 %v1004
        %v1006 = vpop.xlane.xlu0 %1005
        %v1007 = vmax.f32 %v971, %v972
        %1008 = vmax.xlane.f32.xlu0 %v1007
        %v1009 = vpop.xlane.xlu0 %1008
        %v1010 = vmax.f32 %v973, %v974
        %1011 = vmax.xlane.f32.xlu0 %v1010
        %v1012 = vpop.xlane.xlu0 %1011
        %v1013 = vmax.f32 %v975, %v976
        %1014 = vmax.xlane.f32.xlu0 %v1013
        %v1015 = vpop.xlane.xlu0 %1014
        %v1016 = vmax.f32 %v977, %v978
        %1017 = vmax.xlane.f32.xlu0 %v1016
        %v1018 = vpop.xlane.xlu0 %1017
        %v1019 = vmax.f32 %v979, %v980
        %1020 = vmax.xlane.f32.xlu0 %v1019
        %v1021 = vpop.xlane.xlu0 %1020
        %v1022 = vmax.f32 %v981, %v982
        %1023 = vmax.xlane.f32.xlu0 %v1022
        %v1024 = vpop.xlane.xlu0 %1023
        %v1025 = vmax.f32 %v983, %v984
        %1026 = vmax.xlane.f32.xlu0 %v1025
        %v1027 = vpop.xlane.xlu0 %1026
        %v1028 = vmax.f32 %v985, %v986
        %1029 = vmax.xlane.f32.xlu0 %v1028
        %v1030 = vpop.xlane.xlu0 %1029
        %v1031 = vmax.f32 %v987, %v988
        %1032 = vmax.xlane.f32.xlu0 %v1031
        %v1033 = vpop.xlane.xlu0 %1032
        %v1034 = vmax.f32 %v989, %v990
        %1035 = vmax.xlane.f32.xlu0 %v1034
        %v1036 = vpop.xlane.xlu0 %1035
        %v1037 = vmax.f32 %v991, %v992
        %1038 = vmax.xlane.f32.xlu0 %v1037
        %v1039 = vpop.xlane.xlu0 %1038
        %v1040 = vmax.f32 %v993, %v994
        %1041 = vmax.xlane.f32.xlu0 %v1040
        %v1042 = vpop.xlane.xlu0 %1041
        %v1043 = vsub.f32 %v963, %v997
        %v1044 = vsub.f32 %v964, %v997
        %v1045 = vsub.f32 %v965, %v1000
        %v1046 = vsub.f32 %v966, %v1000
        %v1047 = vsub.f32 %v967, %v1003
        %v1048 = vsub.f32 %v968, %v1003
        %v1049 = vsub.f32 %v969, %v1006
        %v1050 = vsub.f32 %v970, %v1006
        %v1051 = vsub.f32 %v971, %v1009
        %v1052 = vsub.f32 %v972, %v1009
        %v1053 = vsub.f32 %v973, %v1012
        %v1054 = vsub.f32 %v974, %v1012
        %v1055 = vsub.f32 %v975, %v1015
        %v1056 = vsub.f32 %v976, %v1015
        %v1057 = vsub.f32 %v977, %v1018
        %v1058 = vsub.f32 %v978, %v1018
        %v1059 = vsub.f32 %v979, %v1021
        %v1060 = vsub.f32 %v980, %v1021
        %v1061 = vsub.f32 %v981, %v1024
        %v1062 = vsub.f32 %v982, %v1024
        %v1063 = vsub.f32 %v983, %v1027
        %v1064 = vsub.f32 %v984, %v1027
        %v1065 = vsub.f32 %v985, %v1030
        %v1066 = vsub.f32 %v986, %v1030
        %v1067 = vsub.f32 %v987, %v1033
        %v1068 = vsub.f32 %v988, %v1033
        %v1069 = vsub.f32 %v989, %v1036
        %v1070 = vsub.f32 %v990, %v1036
        %v1071 = vsub.f32 %v991, %v1039
        %v1072 = vsub.f32 %v992, %v1039
        %v1073 = vsub.f32 %v993, %v1042
        %v1074 = vsub.f32 %v994, %v1042
        %v1075 = vmul.f32 %v1043, 1.442695
        %v1076 = vpow.pop %v1075
        %v1077 = vmul.f32 %v1044, 1.442695
        %v1078 = vpow.pop %v1077
        %v1079 = vmul.f32 %v1045, 1.442695
        %v1080 = vpow.pop %v1079
        %v1081 = vmul.f32 %v1046, 1.442695
        %v1082 = vpow.pop %v1081
        %v1083 = vmul.f32 %v1047, 1.442695
        %v1084 = vpow.pop %v1083
        %v1085 = vmul.f32 %v1048, 1.442695
        %v1086 = vpow.pop %v1085
        %v1087 = vmul.f32 %v1049, 1.442695
        %v1088 = vpow.pop %v1087
        %v1089 = vmul.f32 %v1050, 1.442695
        %v1090 = vpow.pop %v1089
        %v1091 = vmul.f32 %v1051, 1.442695
        %v1092 = vpow.pop %v1091
        %v1093 = vmul.f32 %v1052, 1.442695
        %v1094 = vpow.pop %v1093
        %v1095 = vmul.f32 %v1053, 1.442695
        %v1096 = vpow.pop %v1095
        %v1097 = vmul.f32 %v1054, 1.442695
        %v1098 = vpow.pop %v1097
        %v1099 = vmul.f32 %v1055, 1.442695
        %v1100 = vpow.pop %v1099
        %v1101 = vmul.f32 %v1056, 1.442695
        %v1102 = vpow.pop %v1101
        %v1103 = vmul.f32 %v1057, 1.442695
        %v1104 = vpow.pop %v1103
        %v1105 = vmul.f32 %v1058, 1.442695
        %v1106 = vpow.pop %v1105
        %v1107 = vmul.f32 %v1059, 1.442695
        %v1108 = vpow.pop %v1107
        %v1109 = vmul.f32 %v1060, 1.442695
        %v1110 = vpow.pop %v1109
        %v1111 = vmul.f32 %v1061, 1.442695
        %v1112 = vpow.pop %v1111
        %v1113 = vmul.f32 %v1062, 1.442695
        %v1114 = vpow.pop %v1113
        %v1115 = vmul.f32 %v1063, 1.442695
        %v1116 = vpow.pop %v1115
        %v1117 = vmul.f32 %v1064, 1.442695
        %v1118 = vpow.pop %v1117
        %v1119 = vmul.f32 %v1065, 1.442695
        %v1120 = vpow.pop %v1119
        %v1121 = vmul.f32 %v1066, 1.442695
        %v1122 = vpow.pop %v1121
        %v1123 = vmul.f32 %v1067, 1.442695
        %v1124 = vpow.pop %v1123
        %v1125 = vmul.f32 %v1068, 1.442695
        %v1126 = vpow.pop %v1125
        %v1127 = vmul.f32 %v1069, 1.442695
        %v1128 = vpow.pop %v1127
        %v1129 = vmul.f32 %v1070, 1.442695
        %v1130 = vpow.pop %v1129
        %v1131 = vmul.f32 %v1071, 1.442695
        %v1132 = vpow.pop %v1131
        %v1133 = vmul.f32 %v1072, 1.442695
        %v1134 = vpow.pop %v1133
        %v1135 = vmul.f32 %v1073, 1.442695
        %v1136 = vpow.pop %v1135
        %v1137 = vmul.f32 %v1074, 1.442695
        %v1138 = vpow.pop %v1137
        %v1139 = vadd.f32 %v1076, %v1078
        %1140 = vadd.xlane.f32.xlu0 %v1139
        %v1141 = vpop.xlane.xlu0 %1140
        %v1142 = vadd.f32 %v1080, %v1082
        %1143 = vadd.xlane.f32.xlu0 %v1142
        %v1144 = vpop.xlane.xlu0 %1143
        %v1145 = vadd.f32 %v1084, %v1086
        %1146 = vadd.xlane.f32.xlu0 %v1145
        %v1147 = vpop.xlane.xlu0 %1146
        %v1148 = vadd.f32 %v1088, %v1090
        %1149 = vadd.xlane.f32.xlu0 %v1148
        %v1150 = vpop.xlane.xlu0 %1149
        %v1151 = vadd.f32 %v1092, %v1094
        %1152 = vadd.xlane.f32.xlu0 %v1151
        %v1153 = vpop.xlane.xlu0 %1152
        %v1154 = vadd.f32 %v1096, %v1098
        %1155 = vadd.xlane.f32.xlu0 %v1154
        %v1156 = vpop.xlane.xlu0 %1155
        %v1157 = vadd.f32 %v1100, %v1102
        %1158 = vadd.xlane.f32.xlu0 %v1157
        %v1159 = vpop.xlane.xlu0 %1158
        %v1160 = vadd.f32 %v1104, %v1106
        %1161 = vadd.xlane.f32.xlu0 %v1160
        %v1162 = vpop.xlane.xlu0 %1161
        %v1163 = vadd.f32 %v1108, %v1110
        %1164 = vadd.xlane.f32.xlu0 %v1163
        %v1165 = vpop.xlane.xlu0 %1164
        %v1166 = vadd.f32 %v1112, %v1114
        %1167 = vadd.xlane.f32.xlu0 %v1166
        %v1168 = vpop.xlane.xlu0 %1167
        %v1169 = vadd.f32 %v1116, %v1118
        %1170 = vadd.xlane.f32.xlu0 %v1169
        %v1171 = vpop.xlane.xlu0 %1170
        %v1172 = vadd.f32 %v1120, %v1122
        %1173 = vadd.xlane.f32.xlu0 %v1172
        %v1174 = vpop.xlane.xlu0 %1173
        %v1175 = vadd.f32 %v1124, %v1126
        %1176 = vadd.xlane.f32.xlu0 %v1175
        %v1177 = vpop.xlane.xlu0 %1176
        %v1178 = vadd.f32 %v1128, %v1130
        %1179 = vadd.xlane.f32.xlu0 %v1178
        %v1180 = vpop.xlane.xlu0 %1179
        %v1181 = vadd.f32 %v1132, %v1134
        %1182 = vadd.xlane.f32.xlu0 %v1181
        %v1183 = vpop.xlane.xlu0 %1182
        %v1184 = vadd.f32 %v1136, %v1138
        %1185 = vadd.xlane.f32.xlu0 %v1184
        %v1186 = vpop.xlane.xlu0 %1185
        %v1187 = vrcp.pop %v1141
        %v1188 = vrcp.pop %v1144
        %v1189 = vrcp.pop %v1147
        %v1190 = vrcp.pop %v1150
        %v1191 = vrcp.pop %v1153
        %v1192 = vrcp.pop %v1156
        %v1193 = vrcp.pop %v1159
        %v1194 = vrcp.pop %v1162
        %v1195 = vrcp.pop %v1165
        %v1196 = vrcp.pop %v1168
        %v1197 = vrcp.pop %v1171
        %v1198 = vrcp.pop %v1174
        %v1199 = vrcp.pop %v1177
        %v1200 = vrcp.pop %v1180
        %v1201 = vrcp.pop %v1183
        %v1202 = vrcp.pop %v1186
        %v1203 = vmul.f32 %v1076, %v1187
        %v1204 = vmul.f32 %v1078, %v1187
        %v1205 = vmul.f32 %v1080, %v1188
        %v1206 = vmul.f32 %v1082, %v1188
        %v1207 = vmul.f32 %v1084, %v1189
        %v1208 = vmul.f32 %v1086, %v1189
        %v1209 = vmul.f32 %v1088, %v1190
        %v1210 = vmul.f32 %v1090, %v1190
        %v1211 = vmul.f32 %v1092, %v1191
        %v1212 = vmul.f32 %v1094, %v1191
        %v1213 = vmul.f32 %v1096, %v1192
        %v1214 = vmul.f32 %v1098, %v1192
        %v1215 = vmul.f32 %v1100, %v1193
        %v1216 = vmul.f32 %v1102, %v1193
        %v1217 = vmul.f32 %v1104, %v1194
        %v1218 = vmul.f32 %v1106, %v1194
        %v1219 = vmul.f32 %v1108, %v1195
        %v1220 = vmul.f32 %v1110, %v1195
        %v1221 = vmul.f32 %v1112, %v1196
        %v1222 = vmul.f32 %v1114, %v1196
        %v1223 = vmul.f32 %v1116, %v1197
        %v1224 = vmul.f32 %v1118, %v1197
        %v1225 = vmul.f32 %v1120, %v1198
        %v1226 = vmul.f32 %v1122, %v1198
        %v1227 = vmul.f32 %v1124, %v1199
        %v1228 = vmul.f32 %v1126, %v1199
        %v1229 = vmul.f32 %v1128, %v1200
        %v1230 = vmul.f32 %v1130, %v1200
        %v1231 = vmul.f32 %v1132, %v1201
        %v1232 = vmul.f32 %v1134, %v1201
        %v1233 = vmul.f32 %v1136, %v1202
        %v1234 = vmul.f32 %v1138, %v1202
        %v1237 = vunpack.c.l.s4 1983009808
        %v1238 = vunpack.c.0.s8 %v1237
        %v1239 = vlaneseq
        %v1240 = vshrl.u32 %v1239, 7
        %v1241 = vsub.s32 %v1238, %v1240
        %v1242 = vrot.slane %v706, %v1241
        %v1243 = vcombine.high %v1242, %v1242
        %v1246 = vpack.c.bf16 %v1242, %v1242
        %v1247 = vpack.c.bf16 %v1243, %v1243
        %v1248 = vpack.c.bf16 %v1205, %v1203
        %v1249 = vpack.c.bf16 %v1206, %v1204
        %v1250 = vpack.c.bf16 %v1209, %v1207
        %v1251 = vpack.c.bf16 %v1210, %v1208
        %v1252 = vpack.c.bf16 %v1213, %v1211
        %v1253 = vpack.c.bf16 %v1214, %v1212
        %v1254 = vpack.c.bf16 %v1217, %v1215
        %v1255 = vpack.c.bf16 %v1218, %v1216
        %v1256 = vpack.c.bf16 %v1221, %v1219
        %v1257 = vpack.c.bf16 %v1222, %v1220
        %v1258 = vpack.c.bf16 %v1225, %v1223
        %v1259 = vpack.c.bf16 %v1226, %v1224
        %v1260 = vpack.c.bf16 %v1229, %v1227
        %v1261 = vpack.c.bf16 %v1230, %v1228
        %v1262 = vpack.c.bf16 %v1233, %v1231
        %v1263 = vpack.c.bf16 %v1234, %v1232
        %1264 = vmatprep.subr.bf16.mxu0 %v1263
        %1265 = vmatpush1.bf16.xpose.msra.mxu0 %v1262
        %1266 = vmatprep.subr.bf16.mxu0 %v1261
        %1267 = vmatpush1.bf16.xpose.msra.mxu0 %v1260
        %1268 = vmatprep.subr.bf16.mxu0 %v1259
        %1269 = vmatpush1.bf16.xpose.msra.mxu0 %v1258
        %1270 = vmatprep.subr.bf16.mxu0 %v1257
        %1271 = vmatpush1.bf16.xpose.msra.mxu0 %v1256
        %1272 = vmatprep.subr.bf16.mxu0 %v1255
        %1273 = vmatpush1.bf16.xpose.msra.mxu0 %v1254
        %1274 = vmatprep.subr.bf16.mxu0 %v1253
        %1275 = vmatpush1.bf16.xpose.msra.mxu0 %v1252
        %1276 = vmatprep.subr.bf16.mxu0 %v1251
        %1277 = vmatpush1.bf16.xpose.msra.mxu0 %v1250
        %1278 = vmatprep.subr.bf16.mxu0 %v1249
        %1279 = vmatpush1.bf16.xpose.msra.mxu0 %v1248
        %1280 = vmatprep.subr.bf16.mxu0 0
        %1281 = vmatpush2.bf16.xpose.msra.mxu0 0
        %1282 = vmatprep.subr.bf16.mxu0 0
        %1283 = vmatpush2.bf16.xpose.msra.mxu0 0
        %1284 = vmatprep.subr.bf16.mxu0 0
        %1285 = vmatpush2.bf16.xpose.msra.mxu0 0
        %1286 = vmatprep.subr.bf16.mxu0 0
        %1287 = vmatpush2.bf16.xpose.msra.mxu0 0
        %1288 = vmatprep.subr.bf16.mxu0 0
        %1289 = vmatpush2.bf16.xpose.msra.mxu0 0
        %1290 = vmatprep.subr.bf16.mxu0 0
        %1291 = vmatpush2.bf16.xpose.msra.mxu0 0
        %1292 = vmatprep.subr.bf16.mxu0 0
        %1293 = vmatpush2.bf16.xpose.msra.mxu0 0
        %1294 = vmatprep.subr.bf16.mxu0 0
        %1295 = vmatpush2.bf16.xpose.msra.mxu0 0
        %1296 = vmatprep.mubr.bf16.mxu0 %v1247
        %1297 = vmatmul.mubr.bf16.gmra.mxu0 %v1246
        %v1298 = vpop.f32.mrf.mxu0
        %v1299 = vadd.f32 0.0, %v1298
        %v1300 = vpop.f32.mrf.mxu0
        %v1301 = vpop.f32.mrf.mxu0
        %v1302 = vpop.f32.mrf.mxu0
        %1303 = vdwg.mxu0
        %s1304 = sadd.s32 %s695, 2
        %s1305 = smul.addr %s1304, 2
        %s1306 = scalar_lea.vmem [#allocation2], %s1305
        %v1307 = vld [vmem:[%s1306] sm:$0x3]
        %s1308 = scalar_lea.vmem [#allocation2], 12
        %v1309 = vld [vmem:[%s1308] sm:$0xf]
        %s1310 = scalar_lea.vmem [#allocation2], 20
        %v1311 = vld [vmem:[%s1310] sm:$0xf]
        %1312 = vxpose.xlu0.b32.start [1/16] %v1307, 128
        %1313 = vxpose.xlu0.b32.cont [2/16] 0.0, 128
        %1314 = vxpose.xlu0.b32.cont [3/16] 0.0, 128
        %1315 = vxpose.xlu0.b32.cont [4/16] 0.0, 128
        %1316 = vxpose.xlu0.b32.cont [5/16] 0.0, 128
        %1317 = vxpose.xlu0.b32.cont [6/16] 0.0, 128
        %1318 = vxpose.xlu0.b32.cont [7/16] 0.0, 128
        %1319 = vxpose.xlu0.b32.cont [8/16] 0.0, 128
        %1320 = vxpose.xlu0.b32.cont [9/16] 0.0, 128
        %1321 = vxpose.xlu0.b32.cont [10/16] 0.0, 128
        %1322 = vxpose.xlu0.b32.cont [11/16] 0.0, 128
        %1323 = vxpose.xlu0.b32.cont [12/16] 0.0, 128
        %1324 = vxpose.xlu0.b32.cont [13/16] 0.0, 128
        %1325 = vxpose.xlu0.b32.cont [14/16] 0.0, 128
        %1326 = vxpose.xlu0.b32.cont [15/16] 0.0, 128
        %1327 = vxpose.xlu0.b32.end [16/16] 0.0, 128
        %v1328 = vpop.trf.xlu0
        %v1329 = vpop.trf.xlu0
        %v1330 = vpop.trf.xlu0
        %v1331 = vpop.trf.xlu0
        %v1332 = vpop.trf.xlu0
        %v1333 = vpop.trf.xlu0
        %v1334 = vpop.trf.xlu0
        %v1335 = vpop.trf.xlu0
        %v1336 = vpop.trf.xlu0
        %v1337 = vpop.trf.xlu0
        %v1338 = vpop.trf.xlu0
        %v1339 = vpop.trf.xlu0
        %v1340 = vpop.trf.xlu0
        %v1341 = vpop.trf.xlu0
        %v1342 = vpop.trf.xlu0
        %v1343 = vpop.trf.xlu0
        %v1346 = vunpack.c.l.s4 1983009808
        %v1347 = vunpack.c.0.s8 %v1346
        %v1348 = vlaneseq
        %v1349 = vshrl.u32 %v1348, 7
        %v1350 = vsub.s32 %v1347, %v1349
        %v1351 = vrot.slane %v1309, %v1350
        %v1352 = vcombine.high %v1351, %v1351
        %v1354 = vsel %vm748, %v1328, 0
        %v1357 = vsel %vm748, %v1329, 0
        %v1360 = vsel %vm748, %v1330, 0
        %v1363 = vsel %vm748, %v1331, 0
        %v1366 = vsel %vm748, %v1332, 0
        %v1369 = vsel %vm748, %v1333, 0
        %v1372 = vsel %vm748, %v1334, 0
        %v1375 = vsel %vm748, %v1335, 0
        %v1378 = vsel %vm748, %v1336, 0
        %v1381 = vsel %vm748, %v1337, 0
        %v1384 = vsel %vm748, %v1338, 0
        %v1387 = vsel %vm748, %v1339, 0
        %v1390 = vsel %vm748, %v1340, 0
        %v1393 = vsel %vm748, %v1341, 0
        %v1396 = vsel %vm748, %v1342, 0
        %v1399 = vsel %vm748, %v1343, 0
        %v1401 = vsel %vm797, %v1351, 0
        %v1403 = vsel %vm797, %v1352, 0
        %1405 = vmatprep.subr.mxu0 0.0
        %1406 = vmatpush1.msra.mxu0 0.0
        %1407 = vmatprep.subr.mxu0 0.0
        %1408 = vmatpush1.msra.mxu0 0.0
        %1409 = vmatprep.subr.mxu0 0.0
        %1410 = vmatpush1.msra.mxu0 0.0
        %1411 = vmatprep.subr.mxu0 0.0
        %1412 = vmatpush1.msra.mxu0 0.0
        %1413 = vmatprep.subr.mxu0 0.0
        %1414 = vmatpush1.msra.mxu0 0.0
        %1415 = vmatprep.subr.mxu0 0.0
        %1416 = vmatpush1.msra.mxu0 0.0
        %1417 = vmatprep.subr.mxu0 0.0
        %1418 = vmatpush1.msra.mxu0 0.0
        %1419 = vmatprep.subr.mxu0 0.0
        %1420 = vmatpush1.msra.mxu0 0.0
        %1421 = vmatprep.subr.mxu0 0.0
        %1422 = vmatpush1.msra.mxu0 0.0
        %1423 = vmatprep.subr.mxu0 0.0
        %1424 = vmatpush1.msra.mxu0 0.0
        %1425 = vmatprep.subr.mxu0 0.0
        %1426 = vmatpush1.msra.mxu0 0.0
        %1427 = vmatprep.subr.mxu0 0.0
        %1428 = vmatpush1.msra.mxu0 0.0
        %1429 = vmatprep.subr.mxu0 0.0
        %1430 = vmatpush1.msra.mxu0 0.0
        %1431 = vmatprep.subr.mxu0 0.0
        %1432 = vmatpush1.msra.mxu0 0.0
        %1433 = vmatprep.subr.mxu0 0.0
        %1434 = vmatpush1.msra.mxu0 0.0
        %1435 = vmatprep.subr.mxu0 %v1403
        %1436 = vmatpush1.msra.mxu0 %v1401
        %1437 = vmatprep.subr.mxu0 0.0
        %1438 = vmatpush2.msra.mxu0 0.0
        %1439 = vmatprep.subr.mxu0 0.0
        %1440 = vmatpush2.msra.mxu0 0.0
        %1441 = vmatprep.subr.mxu0 0.0
        %1442 = vmatpush2.msra.mxu0 0.0
        %1443 = vmatprep.subr.mxu0 0.0
        %1444 = vmatpush2.msra.mxu0 0.0
        %1445 = vmatprep.subr.mxu0 0.0
        %1446 = vmatpush2.msra.mxu0 0.0
        %1447 = vmatprep.subr.mxu0 0.0
        %1448 = vmatpush2.msra.mxu0 0.0
        %1449 = vmatprep.subr.mxu0 0.0
        %1450 = vmatpush2.msra.mxu0 0.0
        %1451 = vmatprep.subr.mxu0 0.0
        %1452 = vmatpush2.msra.mxu0 0.0
        %1453 = vmatprep.subr.mxu0 0.0
        %1454 = vmatpush2.msra.mxu0 0.0
        %1455 = vmatprep.subr.mxu0 0.0
        %1456 = vmatpush2.msra.mxu0 0.0
        %1457 = vmatprep.subr.mxu0 0.0
        %1458 = vmatpush2.msra.mxu0 0.0
        %1459 = vmatprep.subr.mxu0 0.0
        %1460 = vmatpush2.msra.mxu0 0.0
        %1461 = vmatprep.subr.mxu0 0.0
        %1462 = vmatpush2.msra.mxu0 0.0
        %1463 = vmatprep.subr.mxu0 0.0
        %1464 = vmatpush2.msra.mxu0 0.0
        %1465 = vmatprep.subr.mxu0 0.0
        %1466 = vmatpush2.msra.mxu0 0.0
        %1467 = vmatprep.subr.mxu0 0.0
        %1468 = vmatpush2.msra.mxu0 0.0
        %1469 = vmatprep.mubr.f32.mxu0 0.0
        %1470 = vmatmul.mubr.f32.gmra.mxu0 %v1354
        %v1471 = vpop.f32.mrf.mxu0
        %v1472 = vadd.f32 0.0, %v1471
        %v1473 = vpop.f32.mrf.mxu0
        %v1474 = vadd.f32 0.0, %v1473
        %1475 = vmatprep.mubr.f32.mxu0 0.0
        %1476 = vmatmul.mubr.f32.gmra.mxu0 %v1357
        %v1477 = vpop.f32.mrf.mxu0
        %v1478 = vadd.f32 0.0, %v1477
        %v1479 = vpop.f32.mrf.mxu0
        %v1480 = vadd.f32 0.0, %v1479
        %1481 = vmatprep.mubr.f32.mxu0 0.0
        %1482 = vmatmul.mubr.f32.gmra.mxu0 %v1360
        %v1483 = vpop.f32.mrf.mxu0
        %v1484 = vadd.f32 0.0, %v1483
        %v1485 = vpop.f32.mrf.mxu0
        %v1486 = vadd.f32 0.0, %v1485
        %1487 = vmatprep.mubr.f32.mxu0 0.0
        %1488 = vmatmul.mubr.f32.gmra.mxu0 %v1363
        %v1489 = vpop.f32.mrf.mxu0
        %v1490 = vadd.f32 0.0, %v1489
        %v1491 = vpop.f32.mrf.mxu0
        %v1492 = vadd.f32 0.0, %v1491
        %1493 = vmatprep.mubr.f32.mxu0 0.0
        %1494 = vmatmul.mubr.f32.gmra.mxu0 %v1366
        %v1495 = vpop.f32.mrf.mxu0
        %v1496 = vadd.f32 0.0, %v1495
        %v1497 = vpop.f32.mrf.mxu0
        %v1498 = vadd.f32 0.0, %v1497
        %1499 = vmatprep.mubr.f32.mxu0 0.0
        %1500 = vmatmul.mubr.f32.gmra.mxu0 %v1369
        %v1501 = vpop.f32.mrf.mxu0
        %v1502 = vadd.f32 0.0, %v1501
        %v1503 = vpop.f32.mrf.mxu0
        %v1504 = vadd.f32 0.0, %v1503
        %1505 = vmatprep.mubr.f32.mxu0 0.0
        %1506 = vmatmul.mubr.f32.gmra.mxu0 %v1372
        %v1507 = vpop.f32.mrf.mxu0
        %v1508 = vadd.f32 0.0, %v1507
        %v1509 = vpop.f32.mrf.mxu0
        %v1510 = vadd.f32 0.0, %v1509
        %1511 = vmatprep.mubr.f32.mxu0 0.0
        %1512 = vmatmul.mubr.f32.gmra.mxu0 %v1375
        %v1513 = vpop.f32.mrf.mxu0
        %v1514 = vadd.f32 0.0, %v1513
        %v1515 = vpop.f32.mrf.mxu0
        %v1516 = vadd.f32 0.0, %v1515
        %1517 = vmatprep.mubr.f32.mxu0 0.0
        %1518 = vmatmul.mubr.f32.gmra.mxu0 %v1378
        %v1519 = vpop.f32.mrf.mxu0
        %v1520 = vadd.f32 0.0, %v1519
        %v1521 = vpop.f32.mrf.mxu0
        %v1522 = vadd.f32 0.0, %v1521
        %1523 = vmatprep.mubr.f32.mxu0 0.0
        %1524 = vmatmul.mubr.f32.gmra.mxu0 %v1381
        %v1525 = vpop.f32.mrf.mxu0
        %v1526 = vadd.f32 0.0, %v1525
        %v1527 = vpop.f32.mrf.mxu0
        %v1528 = vadd.f32 0.0, %v1527
        %1529 = vmatprep.mubr.f32.mxu0 0.0
        %1530 = vmatmul.mubr.f32.gmra.mxu0 %v1384
        %v1531 = vpop.f32.mrf.mxu0
        %v1532 = vadd.f32 0.0, %v1531
        %v1533 = vpop.f32.mrf.mxu0
        %v1534 = vadd.f32 0.0, %v1533
        %1535 = vmatprep.mubr.f32.mxu0 0.0
        %1536 = vmatmul.mubr.f32.gmra.mxu0 %v1387
        %v1537 = vpop.f32.mrf.mxu0
        %v1538 = vadd.f32 0.0, %v1537
        %v1539 = vpop.f32.mrf.mxu0
        %v1540 = vadd.f32 0.0, %v1539
        %1541 = vmatprep.mubr.f32.mxu0 0.0
        %1542 = vmatmul.mubr.f32.gmra.mxu0 %v1390
        %v1543 = vpop.f32.mrf.mxu0
        %v1544 = vadd.f32 0.0, %v1543
        %v1545 = vpop.f32.mrf.mxu0
        %v1546 = vadd.f32 0.0, %v1545
        %1547 = vmatprep.mubr.f32.mxu0 0.0
        %1548 = vmatmul.mubr.f32.gmra.mxu0 %v1393
        %v1549 = vpop.f32.mrf.mxu0
        %v1550 = vadd.f32 0.0, %v1549
        %v1551 = vpop.f32.mrf.mxu0
        %v1552 = vadd.f32 0.0, %v1551
        %1553 = vmatprep.mubr.f32.mxu0 0.0
        %1554 = vmatmul.mubr.f32.gmra.mxu0 %v1396
        %v1555 = vpop.f32.mrf.mxu0
        %v1556 = vadd.f32 0.0, %v1555
        %v1557 = vpop.f32.mrf.mxu0
        %v1558 = vadd.f32 0.0, %v1557
        %1559 = vmatprep.mubr.f32.mxu0 0.0
        %1560 = vmatmul.mubr.f32.gmra.mxu0 %v1399
        %v1561 = vpop.f32.mrf.mxu0
        %v1562 = vadd.f32 0.0, %v1561
        %v1563 = vpop.f32.mrf.mxu0
        %v1564 = vadd.f32 0.0, %v1563
        %1565 = vdwg.mxu0
        %v1566 = vmul.f32 %v1472, 0.70710677
        %v1567 = vmul.f32 %v1474, 0.70710677
        %v1568 = vmul.f32 %v1478, 0.70710677
        %v1569 = vmul.f32 %v1480, 0.70710677
        %v1570 = vmul.f32 %v1484, 0.70710677
        %v1571 = vmul.f32 %v1486, 0.70710677
        %v1572 = vmul.f32 %v1490, 0.70710677
        %v1573 = vmul.f32 %v1492, 0.70710677
        %v1574 = vmul.f32 %v1496, 0.70710677
        %v1575 = vmul.f32 %v1498, 0.70710677
        %v1576 = vmul.f32 %v1502, 0.70710677
        %v1577 = vmul.f32 %v1504, 0.70710677
        %v1578 = vmul.f32 %v1508, 0.70710677
        %v1579 = vmul.f32 %v1510, 0.70710677
        %v1580 = vmul.f32 %v1514, 0.70710677
        %v1581 = vmul.f32 %v1516, 0.70710677
        %v1582 = vmul.f32 %v1520, 0.70710677
        %v1583 = vmul.f32 %v1522, 0.70710677
        %v1584 = vmul.f32 %v1526, 0.70710677
        %v1585 = vmul.f32 %v1528, 0.70710677
        %v1586 = vmul.f32 %v1532, 0.70710677
        %v1587 = vmul.f32 %v1534, 0.70710677
        %v1588 = vmul.f32 %v1538, 0.70710677
        %v1589 = vmul.f32 %v1540, 0.70710677
        %v1590 = vmul.f32 %v1544, 0.70710677
        %v1591 = vmul.f32 %v1546, 0.70710677
        %v1592 = vmul.f32 %v1550, 0.70710677
        %v1593 = vmul.f32 %v1552, 0.70710677
        %v1594 = vmul.f32 %v1556, 0.70710677
        %v1595 = vmul.f32 %v1558, 0.70710677
        %v1596 = vmul.f32 %v1562, 0.70710677
        %v1597 = vmul.f32 %v1564, 0.70710677
        %v1598 = vmax.f32 %v1566, %v1567
        %1599 = vmax.xlane.f32.xlu0 %v1598
        %v1600 = vpop.xlane.xlu0 %1599
        %v1601 = vmax.f32 %v1568, %v1569
        %1602 = vmax.xlane.f32.xlu0 %v1601
        %v1603 = vpop.xlane.xlu0 %1602
        %v1604 = vmax.f32 %v1570, %v1571
        %1605 = vmax.xlane.f32.xlu0 %v1604
        %v1606 = vpop.xlane.xlu0 %1605
        %v1607 = vmax.f32 %v1572, %v1573
        %1608 = vmax.xlane.f32.xlu0 %v1607
        %v1609 = vpop.xlane.xlu0 %1608
        %v1610 = vmax.f32 %v1574, %v1575
        %1611 = vmax.xlane.f32.xlu0 %v1610
        %v1612 = vpop.xlane.xlu0 %1611
        %v1613 = vmax.f32 %v1576, %v1577
        %1614 = vmax.xlane.f32.xlu0 %v1613
        %v1615 = vpop.xlane.xlu0 %1614
        %v1616 = vmax.f32 %v1578, %v1579
        %1617 = vmax.xlane.f32.xlu0 %v1616
        %v1618 = vpop.xlane.xlu0 %1617
        %v1619 = vmax.f32 %v1580, %v1581
        %1620 = vmax.xlane.f32.xlu0 %v1619
        %v1621 = vpop.xlane.xlu0 %1620
        %v1622 = vmax.f32 %v1582, %v1583
        %1623 = vmax.xlane.f32.xlu0 %v1622
        %v1624 = vpop.xlane.xlu0 %1623
        %v1625 = vmax.f32 %v1584, %v1585
        %1626 = vmax.xlane.f32.xlu0 %v1625
        %v1627 = vpop.xlane.xlu0 %1626
        %v1628 = vmax.f32 %v1586, %v1587
        %1629 = vmax.xlane.f32.xlu0 %v1628
        %v1630 = vpop.xlane.xlu0 %1629
        %v1631 = vmax.f32 %v1588, %v1589
        %1632 = vmax.xlane.f32.xlu0 %v1631
        %v1633 = vpop.xlane.xlu0 %1632
        %v1634 = vmax.f32 %v1590, %v1591
        %1635 = vmax.xlane.f32.xlu0 %v1634
        %v1636 = vpop.xlane.xlu0 %1635
        %v1637 = vmax.f32 %v1592, %v1593
        %1638 = vmax.xlane.f32.xlu0 %v1637
        %v1639 = vpop.xlane.xlu0 %1638
        %v1640 = vmax.f32 %v1594, %v1595
        %1641 = vmax.xlane.f32.xlu0 %v1640
        %v1642 = vpop.xlane.xlu0 %1641
        %v1643 = vmax.f32 %v1596, %v1597
        %1644 = vmax.xlane.f32.xlu0 %v1643
        %v1645 = vpop.xlane.xlu0 %1644
        %v1646 = vsub.f32 %v1566, %v1600
        %v1647 = vsub.f32 %v1567, %v1600
        %v1648 = vsub.f32 %v1568, %v1603
        %v1649 = vsub.f32 %v1569, %v1603
        %v1650 = vsub.f32 %v1570, %v1606
        %v1651 = vsub.f32 %v1571, %v1606
        %v1652 = vsub.f32 %v1572, %v1609
        %v1653 = vsub.f32 %v1573, %v1609
        %v1654 = vsub.f32 %v1574, %v1612
        %v1655 = vsub.f32 %v1575, %v1612
        %v1656 = vsub.f32 %v1576, %v1615
        %v1657 = vsub.f32 %v1577, %v1615
        %v1658 = vsub.f32 %v1578, %v1618
        %v1659 = vsub.f32 %v1579, %v1618
        %v1660 = vsub.f32 %v1580, %v1621
        %v1661 = vsub.f32 %v1581, %v1621
        %v1662 = vsub.f32 %v1582, %v1624
        %v1663 = vsub.f32 %v1583, %v1624
        %v1664 = vsub.f32 %v1584, %v1627
        %v1665 = vsub.f32 %v1585, %v1627
        %v1666 = vsub.f32 %v1586, %v1630
        %v1667 = vsub.f32 %v1587, %v1630
        %v1668 = vsub.f32 %v1588, %v1633
        %v1669 = vsub.f32 %v1589, %v1633
        %v1670 = vsub.f32 %v1590, %v1636
        %v1671 = vsub.f32 %v1591, %v1636
        %v1672 = vsub.f32 %v1592, %v1639
        %v1673 = vsub.f32 %v1593, %v1639
        %v1674 = vsub.f32 %v1594, %v1642
        %v1675 = vsub.f32 %v1595, %v1642
        %v1676 = vsub.f32 %v1596, %v1645
        %v1677 = vsub.f32 %v1597, %v1645
        %v1678 = vmul.f32 %v1646, 1.442695
        %v1679 = vpow.pop %v1678
        %v1680 = vmul.f32 %v1647, 1.442695
        %v1681 = vpow.pop %v1680
        %v1682 = vmul.f32 %v1648, 1.442695
        %v1683 = vpow.pop %v1682
        %v1684 = vmul.f32 %v1649, 1.442695
        %v1685 = vpow.pop %v1684
        %v1686 = vmul.f32 %v1650, 1.442695
        %v1687 = vpow.pop %v1686
        %v1688 = vmul.f32 %v1651, 1.442695
        %v1689 = vpow.pop %v1688
        %v1690 = vmul.f32 %v1652, 1.442695
        %v1691 = vpow.pop %v1690
        %v1692 = vmul.f32 %v1653, 1.442695
        %v1693 = vpow.pop %v1692
        %v1694 = vmul.f32 %v1654, 1.442695
        %v1695 = vpow.pop %v1694
        %v1696 = vmul.f32 %v1655, 1.442695
        %v1697 = vpow.pop %v1696
        %v1698 = vmul.f32 %v1656, 1.442695
        %v1699 = vpow.pop %v1698
        %v1700 = vmul.f32 %v1657, 1.442695
        %v1701 = vpow.pop %v1700
        %v1702 = vmul.f32 %v1658, 1.442695
        %v1703 = vpow.pop %v1702
        %v1704 = vmul.f32 %v1659, 1.442695
        %v1705 = vpow.pop %v1704
        %v1706 = vmul.f32 %v1660, 1.442695
        %v1707 = vpow.pop %v1706
        %v1708 = vmul.f32 %v1661, 1.442695
        %v1709 = vpow.pop %v1708
        %v1710 = vmul.f32 %v1662, 1.442695
        %v1711 = vpow.pop %v1710
        %v1712 = vmul.f32 %v1663, 1.442695
        %v1713 = vpow.pop %v1712
        %v1714 = vmul.f32 %v1664, 1.442695
        %v1715 = vpow.pop %v1714
        %v1716 = vmul.f32 %v1665, 1.442695
        %v1717 = vpow.pop %v1716
        %v1718 = vmul.f32 %v1666, 1.442695
        %v1719 = vpow.pop %v1718
        %v1720 = vmul.f32 %v1667, 1.442695
        %v1721 = vpow.pop %v1720
        %v1722 = vmul.f32 %v1668, 1.442695
        %v1723 = vpow.pop %v1722
        %v1724 = vmul.f32 %v1669, 1.442695
        %v1725 = vpow.pop %v1724
        %v1726 = vmul.f32 %v1670, 1.442695
        %v1727 = vpow.pop %v1726
        %v1728 = vmul.f32 %v1671, 1.442695
        %v1729 = vpow.pop %v1728
        %v1730 = vmul.f32 %v1672, 1.442695
        %v1731 = vpow.pop %v1730
        %v1732 = vmul.f32 %v1673, 1.442695
        %v1733 = vpow.pop %v1732
        %v1734 = vmul.f32 %v1674, 1.442695
        %v1735 = vpow.pop %v1734
        %v1736 = vmul.f32 %v1675, 1.442695
        %v1737 = vpow.pop %v1736
        %v1738 = vmul.f32 %v1676, 1.442695
        %v1739 = vpow.pop %v1738
        %v1740 = vmul.f32 %v1677, 1.442695
        %v1741 = vpow.pop %v1740
        %v1742 = vadd.f32 %v1679, %v1681
        %1743 = vadd.xlane.f32.xlu0 %v1742
        %v1744 = vpop.xlane.xlu0 %1743
        %v1745 = vadd.f32 %v1683, %v1685
        %1746 = vadd.xlane.f32.xlu0 %v1745
        %v1747 = vpop.xlane.xlu0 %1746
        %v1748 = vadd.f32 %v1687, %v1689
        %1749 = vadd.xlane.f32.xlu0 %v1748
        %v1750 = vpop.xlane.xlu0 %1749
        %v1751 = vadd.f32 %v1691, %v1693
        %1752 = vadd.xlane.f32.xlu0 %v1751
        %v1753 = vpop.xlane.xlu0 %1752
        %v1754 = vadd.f32 %v1695, %v1697
        %1755 = vadd.xlane.f32.xlu0 %v1754
        %v1756 = vpop.xlane.xlu0 %1755
        %v1757 = vadd.f32 %v1699, %v1701
        %1758 = vadd.xlane.f32.xlu0 %v1757
        %v1759 = vpop.xlane.xlu0 %1758
        %v1760 = vadd.f32 %v1703, %v1705
        %1761 = vadd.xlane.f32.xlu0 %v1760
        %v1762 = vpop.xlane.xlu0 %1761
        %v1763 = vadd.f32 %v1707, %v1709
        %1764 = vadd.xlane.f32.xlu0 %v1763
        %v1765 = vpop.xlane.xlu0 %1764
        %v1766 = vadd.f32 %v1711, %v1713
        %1767 = vadd.xlane.f32.xlu0 %v1766
        %v1768 = vpop.xlane.xlu0 %1767
        %v1769 = vadd.f32 %v1715, %v1717
        %1770 = vadd.xlane.f32.xlu0 %v1769
        %v1771 = vpop.xlane.xlu0 %1770
        %v1772 = vadd.f32 %v1719, %v1721
        %1773 = vadd.xlane.f32.xlu0 %v1772
        %v1774 = vpop.xlane.xlu0 %1773
        %v1775 = vadd.f32 %v1723, %v1725
        %1776 = vadd.xlane.f32.xlu0 %v1775
        %v1777 = vpop.xlane.xlu0 %1776
        %v1778 = vadd.f32 %v1727, %v1729
        %1779 = vadd.xlane.f32.xlu0 %v1778
        %v1780 = vpop.xlane.xlu0 %1779
        %v1781 = vadd.f32 %v1731, %v1733
        %1782 = vadd.xlane.f32.xlu0 %v1781
        %v1783 = vpop.xlane.xlu0 %1782
        %v1784 = vadd.f32 %v1735, %v1737
        %1785 = vadd.xlane.f32.xlu0 %v1784
        %v1786 = vpop.xlane.xlu0 %1785
        %v1787 = vadd.f32 %v1739, %v1741
        %1788 = vadd.xlane.f32.xlu0 %v1787
        %v1789 = vpop.xlane.xlu0 %1788
        %v1790 = vrcp.pop %v1744
        %v1791 = vrcp.pop %v1747
        %v1792 = vrcp.pop %v1750
        %v1793 = vrcp.pop %v1753
        %v1794 = vrcp.pop %v1756
        %v1795 = vrcp.pop %v1759
        %v1796 = vrcp.pop %v1762
        %v1797 = vrcp.pop %v1765
        %v1798 = vrcp.pop %v1768
        %v1799 = vrcp.pop %v1771
        %v1800 = vrcp.pop %v1774
        %v1801 = vrcp.pop %v1777
        %v1802 = vrcp.pop %v1780
        %v1803 = vrcp.pop %v1783
        %v1804 = vrcp.pop %v1786
        %v1805 = vrcp.pop %v1789
        %v1806 = vmul.f32 %v1679, %v1790
        %v1807 = vmul.f32 %v1681, %v1790
        %v1808 = vmul.f32 %v1683, %v1791
        %v1809 = vmul.f32 %v1685, %v1791
        %v1810 = vmul.f32 %v1687, %v1792
        %v1811 = vmul.f32 %v1689, %v1792
        %v1812 = vmul.f32 %v1691, %v1793
        %v1813 = vmul.f32 %v1693, %v1793
        %v1814 = vmul.f32 %v1695, %v1794
        %v1815 = vmul.f32 %v1697, %v1794
        %v1816 = vmul.f32 %v1699, %v1795
        %v1817 = vmul.f32 %v1701, %v1795
        %v1818 = vmul.f32 %v1703, %v1796
        %v1819 = vmul.f32 %v1705, %v1796
        %v1820 = vmul.f32 %v1707, %v1797
        %v1821 = vmul.f32 %v1709, %v1797
        %v1822 = vmul.f32 %v1711, %v1798
        %v1823 = vmul.f32 %v1713, %v1798
        %v1824 = vmul.f32 %v1715, %v1799
        %v1825 = vmul.f32 %v1717, %v1799
        %v1826 = vmul.f32 %v1719, %v1800
        %v1827 = vmul.f32 %v1721, %v1800
        %v1828 = vmul.f32 %v1723, %v1801
        %v1829 = vmul.f32 %v1725, %v1801
        %v1830 = vmul.f32 %v1727, %v1802
        %v1831 = vmul.f32 %v1729, %v1802
        %v1832 = vmul.f32 %v1731, %v1803
        %v1833 = vmul.f32 %v1733, %v1803
        %v1834 = vmul.f32 %v1735, %v1804
        %v1835 = vmul.f32 %v1737, %v1804
        %v1836 = vmul.f32 %v1739, %v1805
        %v1837 = vmul.f32 %v1741, %v1805
        %v1840 = vunpack.c.l.s4 1983009808
        %v1841 = vunpack.c.0.s8 %v1840
        %v1842 = vlaneseq
        %v1843 = vshrl.u32 %v1842, 7
        %v1844 = vsub.s32 %v1841, %v1843
        %v1845 = vrot.slane %v1311, %v1844
        %v1846 = vcombine.high %v1845, %v1845
        %v1849 = vpack.c.bf16 %v1845, %v1845
        %v1850 = vpack.c.bf16 %v1846, %v1846
        %v1851 = vpack.c.bf16 %v1808, %v1806
        %v1852 = vpack.c.bf16 %v1809, %v1807
        %v1853 = vpack.c.bf16 %v1812, %v1810
        %v1854 = vpack.c.bf16 %v1813, %v1811
        %v1855 = vpack.c.bf16 %v1816, %v1814
        %v1856 = vpack.c.bf16 %v1817, %v1815
        %v1857 = vpack.c.bf16 %v1820, %v1818
        %v1858 = vpack.c.bf16 %v1821, %v1819
        %v1859 = vpack.c.bf16 %v1824, %v1822
        %v1860 = vpack.c.bf16 %v1825, %v1823
        %v1861 = vpack.c.bf16 %v1828, %v1826
        %v1862 = vpack.c.bf16 %v1829, %v1827
        %v1863 = vpack.c.bf16 %v1832, %v1830
        %v1864 = vpack.c.bf16 %v1833, %v1831
        %v1865 = vpack.c.bf16 %v1836, %v1834
        %v1866 = vpack.c.bf16 %v1837, %v1835
        %1867 = vmatprep.subr.bf16.mxu0 %v1866
        %1868 = vmatpush1.bf16.xpose.msra.mxu0 %v1865
        %1869 = vmatprep.subr.bf16.mxu0 %v1864
        %1870 = vmatpush1.bf16.xpose.msra.mxu0 %v1863
        %1871 = vmatprep.subr.bf16.mxu0 %v1862
        %1872 = vmatpush1.bf16.xpose.msra.mxu0 %v1861
        %1873 = vmatprep.subr.bf16.mxu0 %v1860
        %1874 = vmatpush1.bf16.xpose.msra.mxu0 %v1859
        %1875 = vmatprep.subr.bf16.mxu0 %v1858
        %1876 = vmatpush1.bf16.xpose.msra.mxu0 %v1857
        %1877 = vmatprep.subr.bf16.mxu0 %v1856
        %1878 = vmatpush1.bf16.xpose.msra.mxu0 %v1855
        %1879 = vmatprep.subr.bf16.mxu0 %v1854
        %1880 = vmatpush1.bf16.xpose.msra.mxu0 %v1853
        %1881 = vmatprep.subr.bf16.mxu0 %v1852
        %1882 = vmatpush1.bf16.xpose.msra.mxu0 %v1851
        %1883 = vmatprep.subr.bf16.mxu0 0
        %1884 = vmatpush2.bf16.xpose.msra.mxu0 0
        %1885 = vmatprep.subr.bf16.mxu0 0
        %1886 = vmatpush2.bf16.xpose.msra.mxu0 0
        %1887 = vmatprep.subr.bf16.mxu0 0
        %1888 = vmatpush2.bf16.xpose.msra.mxu0 0
        %1889 = vmatprep.subr.bf16.mxu0 0
        %1890 = vmatpush2.bf16.xpose.msra.mxu0 0
        %1891 = vmatprep.subr.bf16.mxu0 0
        %1892 = vmatpush2.bf16.xpose.msra.mxu0 0
        %1893 = vmatprep.subr.bf16.mxu0 0
        %1894 = vmatpush2.bf16.xpose.msra.mxu0 0
        %1895 = vmatprep.subr.bf16.mxu0 0
        %1896 = vmatpush2.bf16.xpose.msra.mxu0 0
        %1897 = vmatprep.subr.bf16.mxu0 0
        %1898 = vmatpush2.bf16.xpose.msra.mxu0 0
        %1899 = vmatprep.mubr.bf16.mxu0 %v1850
        %1900 = vmatmul.mubr.bf16.gmra.mxu0 %v1849
        %v1901 = vpop.f32.mrf.mxu0
        %v1902 = vadd.f32 0.0, %v1901
        %v1903 = vpop.f32.mrf.mxu0
        %v1904 = vpop.f32.mrf.mxu0
        %v1905 = vpop.f32.mrf.mxu0
        %1906 = vdwg.mxu0
        %v1908 = vrot.slane %v1902, 6
        %v1910 = vsel %vm797, %v1299, %v1908
        %v1911 = vld [vmem:[%s5] sm:$0xf]
        %v1912 = vld [vmem:[%s6] sm:$0xf]
        %1914 = vset.pattern.permute.xlu0 0
        %1915 = vperm.xlu0 %1914, %v1912
        %v1916 = vpop.permute.xlu0 %1915
        %vm1918 = vcmask 31744
        %v1920 = vsel %vm1918, %v1911, 0
        %vm1922 = vcmask 1043456
        %v1924 = vsel %vm1922, %v1910, 0
        %1926 = vmatprep.subr.mxu0 0.0
        %1927 = vmatpush1.msra.mxu0 0.0
        %1928 = vmatprep.subr.mxu0 0.0
        %1929 = vmatpush1.msra.mxu0 0.0
        %1930 = vmatprep.subr.mxu0 0.0
        %1931 = vmatpush1.msra.mxu0 0.0
        %1932 = vmatprep.subr.mxu0 0.0
        %1933 = vmatpush1.msra.mxu0 0.0
        %1934 = vmatprep.subr.mxu0 0.0
        %1935 = vmatpush1.msra.mxu0 0.0
        %1936 = vmatprep.subr.mxu0 0.0
        %1937 = vmatpush1.msra.mxu0 0.0
        %1938 = vmatprep.subr.mxu0 0.0
        %1939 = vmatpush1.msra.mxu0 0.0
        %1940 = vmatprep.subr.mxu0 0.0
        %1941 = vmatpush1.msra.mxu0 0.0
        %1942 = vmatprep.subr.mxu0 0.0
        %1943 = vmatpush1.msra.mxu0 0.0
        %1944 = vmatprep.subr.mxu0 0.0
        %1945 = vmatpush1.msra.mxu0 0.0
        %1946 = vmatprep.subr.mxu0 0.0
        %1947 = vmatpush1.msra.mxu0 0.0
        %1948 = vmatprep.subr.mxu0 0.0
        %1949 = vmatpush1.msra.mxu0 0.0
        %1950 = vmatprep.subr.mxu0 0.0
        %1951 = vmatpush1.msra.mxu0 0.0
        %1952 = vmatprep.subr.mxu0 0.0
        %1953 = vmatpush1.msra.mxu0 0.0
        %1954 = vmatprep.subr.mxu0 0.0
        %1955 = vmatpush1.msra.mxu0 0.0
        %1956 = vmatprep.subr.mxu0 0.0
        %1957 = vmatpush1.msra.mxu0 %v1924
        %1958 = vmatprep.subr.mxu0 0.0
        %1959 = vmatpush2.msra.mxu0 0.0
        %1960 = vmatprep.subr.mxu0 0.0
        %1961 = vmatpush2.msra.mxu0 0.0
        %1962 = vmatprep.subr.mxu0 0.0
        %1963 = vmatpush2.msra.mxu0 0.0
        %1964 = vmatprep.subr.mxu0 0.0
        %1965 = vmatpush2.msra.mxu0 0.0
        %1966 = vmatprep.subr.mxu0 0.0
        %1967 = vmatpush2.msra.mxu0 0.0
        %1968 = vmatprep.subr.mxu0 0.0
        %1969 = vmatpush2.msra.mxu0 0.0
        %1970 = vmatprep.subr.mxu0 0.0
        %1971 = vmatpush2.msra.mxu0 0.0
        %1972 = vmatprep.subr.mxu0 0.0
        %1973 = vmatpush2.msra.mxu0 0.0
        %1974 = vmatprep.subr.mxu0 0.0
        %1975 = vmatpush2.msra.mxu0 0.0
        %1976 = vmatprep.subr.mxu0 0.0
        %1977 = vmatpush2.msra.mxu0 0.0
        %1978 = vmatprep.subr.mxu0 0.0
        %1979 = vmatpush2.msra.mxu0 0.0
        %1980 = vmatprep.subr.mxu0 0.0
        %1981 = vmatpush2.msra.mxu0 0.0
        %1982 = vmatprep.subr.mxu0 0.0
        %1983 = vmatpush2.msra.mxu0 0.0
        %1984 = vmatprep.subr.mxu0 0.0
        %1985 = vmatpush2.msra.mxu0 0.0
        %1986 = vmatprep.subr.mxu0 0.0
        %1987 = vmatpush2.msra.mxu0 0.0
        %1988 = vmatprep.subr.mxu0 0.0
        %1989 = vmatpush2.msra.mxu0 0.0
        %1990 = vmatprep.mubr.f32.mxu0 0.0
        %1991 = vmatmul.mubr.f32.gmra.mxu0 %v1920
        %v1992 = vpop.f32.mrf.mxu0
        %v1993 = vadd.f32 %v1916, %v1992
        %v1994 = vpop.f32.mrf.mxu0
        %1995 = vdwg.mxu0
        %v1996 = vadd.f32 %v1993, %v699
        %v1997 = vld [vmem:[%s7] sm:$0xf]
        %v1998 = vld [vmem:[%s8] sm:$0xf]
        %v1999 = vsel %vm1922, %v1996, 0.0
        %v2000 = vrot.slane %v1999, 4
        %v2001 = vadd.f32 %v1999, %v2000
        %v2002 = vrot.slane %v2001, 2
        %v2003 = vadd.f32 %v2001, %v2002
        %v2004 = vrot.slane %v2003, 1
        %v2005 = vadd.f32 %v2003, %v2004
        %v2006 = vrcp.pop 4.0
        %v2007 = vmul.f32 %v2005, %v2006
        %v2008 = vsub.f32 %v1996, %v2007
        %v2009 = vmul.f32 %v2008, %v2008
        %v2010 = vsel %vm1922, %v2009, 0.0
        %v2011 = vrot.slane %v2010, 4
        %v2012 = vadd.f32 %v2010, %v2011
        %v2013 = vrot.slane %v2012, 2
        %v2014 = vadd.f32 %v2012, %v2013
        %v2015 = vrot.slane %v2014, 1
        %v2016 = vadd.f32 %v2014, %v2015
        %v2017 = vmul.f32 %v2016, %v2006
        %v2018 = vadd.f32 %v2017, 1e-05
        %v2019 = vrsqrt.pop %v2018
        %v2020 = vmul.f32 %v2008, %v2019
        %2022 = vset.pattern.permute.xlu0 0
        %2023 = vperm.xlu0 %2022, %v1997
        %v2024 = vpop.permute.xlu0 %2023
        %v2026 = vmul.f32 %v2020, %v2024
        %2028 = vset.pattern.permute.xlu0 0
        %2029 = vperm.xlu0 %2028, %v1998
        %v2030 = vpop.permute.xlu0 %2029
        %v2032 = vadd.f32 %v2026, %v2030
        %v2033 = vld [vmem:[%s9] sm:$0xf]
        %v2034 = vld [vmem:[%s10] sm:$0xf]
        %2036 = vset.pattern.permute.xlu0 0
        %2037 = vperm.xlu0 %2036, %v2034
        %v2038 = vpop.permute.xlu0 %2037
        %v2041 = vsel %vm1918, %v2033, 0
        %v2044 = vsel %vm1922, %v2032, 0
        %2046 = vmatprep.subr.mxu0 0.0
        %2047 = vmatpush1.msra.mxu0 0.0
        %2048 = vmatprep.subr.mxu0 0.0
        %2049 = vmatpush1.msra.mxu0 0.0
        %2050 = vmatprep.subr.mxu0 0.0
        %2051 = vmatpush1.msra.mxu0 0.0
        %2052 = vmatprep.subr.mxu0 0.0
        %2053 = vmatpush1.msra.mxu0 0.0
        %2054 = vmatprep.subr.mxu0 0.0
        %2055 = vmatpush1.msra.mxu0 0.0
        %2056 = vmatprep.subr.mxu0 0.0
        %2057 = vmatpush1.msra.mxu0 0.0
        %2058 = vmatprep.subr.mxu0 0.0
        %2059 = vmatpush1.msra.mxu0 0.0
        %2060 = vmatprep.subr.mxu0 0.0
        %2061 = vmatpush1.msra.mxu0 0.0
        %2062 = vmatprep.subr.mxu0 0.0
        %2063 = vmatpush1.msra.mxu0 0.0
        %2064 = vmatprep.subr.mxu0 0.0
        %2065 = vmatpush1.msra.mxu0 0.0
        %2066 = vmatprep.subr.mxu0 0.0
        %2067 = vmatpush1.msra.mxu0 0.0
        %2068 = vmatprep.subr.mxu0 0.0
        %2069 = vmatpush1.msra.mxu0 0.0
        %2070 = vmatprep.subr.mxu0 0.0
        %2071 = vmatpush1.msra.mxu0 0.0
        %2072 = vmatprep.subr.mxu0 0.0
        %2073 = vmatpush1.msra.mxu0 0.0
        %2074 = vmatprep.subr.mxu0 0.0
        %2075 = vmatpush1.msra.mxu0 0.0
        %2076 = vmatprep.subr.mxu0 0.0
        %2077 = vmatpush1.msra.mxu0 %v2044
        %2078 = vmatprep.subr.mxu0 0.0
        %2079 = vmatpush2.msra.mxu0 0.0
        %2080 = vmatprep.subr.mxu0 0.0
        %2081 = vmatpush2.msra.mxu0 0.0
        %2082 = vmatprep.subr.mxu0 0.0
        %2083 = vmatpush2.msra.mxu0 0.0
        %2084 = vmatprep.subr.mxu0 0.0
        %2085 = vmatpush2.msra.mxu0 0.0
        %2086 = vmatprep.subr.mxu0 0.0
        %2087 = vmatpush2.msra.mxu0 0.0
        %2088 = vmatprep.subr.mxu0 0.0
        %2089 = vmatpush2.msra.mxu0 0.0
        %2090 = vmatprep.subr.mxu0 0.0
        %2091 = vmatpush2.msra.mxu0 0.0
        %2092 = vmatprep.subr.mxu0 0.0
        %2093 = vmatpush2.msra.mxu0 0.0
        %2094 = vmatprep.subr.mxu0 0.0
        %2095 = vmatpush2.msra.mxu0 0.0
        %2096 = vmatprep.subr.mxu0 0.0
        %2097 = vmatpush2.msra.mxu0 0.0
        %2098 = vmatprep.subr.mxu0 0.0
        %2099 = vmatpush2.msra.mxu0 0.0
        %2100 = vmatprep.subr.mxu0 0.0
        %2101 = vmatpush2.msra.mxu0 0.0
        %2102 = vmatprep.subr.mxu0 0.0
        %2103 = vmatpush2.msra.mxu0 0.0
        %2104 = vmatprep.subr.mxu0 0.0
        %2105 = vmatpush2.msra.mxu0 0.0
        %2106 = vmatprep.subr.mxu0 0.0
        %2107 = vmatpush2.msra.mxu0 0.0
        %2108 = vmatprep.subr.mxu0 0.0
        %2109 = vmatpush2.msra.mxu0 0.0
        %2110 = vmatprep.mubr.f32.mxu0 0.0
        %2111 = vmatmul.mubr.f32.gmra.mxu0 %v2041
        %v2112 = vpop.f32.mrf.mxu0
        %v2113 = vadd.f32 %v2038, %v2112
        %v2114 = vpop.f32.mrf.mxu0
        %2115 = vdwg.mxu0
        %v2116 = vmul.f32 %v2113, 0.5
        %v2117 = vmul.f32 %v2113, 0.70710677
        %v2118 = verf.f32.pop %v2117
        %v2119 = vadd.f32 %v2118, 1.0
        %v2120 = vmul.f32 %v2116, %v2119
        %v2121 = vld [vmem:[%s11] sm:$0xf]
        %v2122 = vld [vmem:[%s12] sm:$0xf]
        %2124 = vset.pattern.permute.xlu0 0
        %2125 = vperm.xlu0 %2124, %v2122
        %v2126 = vpop.permute.xlu0 %2125
        %v2129 = vsel %vm1918, %v2121, 0
        %v2132 = vsel %vm1922, %v2120, 0
        %2134 = vmatprep.subr.mxu0 0.0
        %2135 = vmatpush1.msra.mxu0 0.0
        %2136 = vmatprep.subr.mxu0 0.0
        %2137 = vmatpush1.msra.mxu0 0.0
        %2138 = vmatprep.subr.mxu0 0.0
        %2139 = vmatpush1.msra.mxu0 0.0
        %2140 = vmatprep.subr.mxu0 0.0
        %2141 = vmatpush1.msra.mxu0 0.0
        %2142 = vmatprep.subr.mxu0 0.0
        %2143 = vmatpush1.msra.mxu0 0.0
        %2144 = vmatprep.subr.mxu0 0.0
        %2145 = vmatpush1.msra.mxu0 0.0
        %2146 = vmatprep.subr.mxu0 0.0
        %2147 = vmatpush1.msra.mxu0 0.0
        %2148 = vmatprep.subr.mxu0 0.0
        %2149 = vmatpush1.msra.mxu0 0.0
        %2150 = vmatprep.subr.mxu0 0.0
        %2151 = vmatpush1.msra.mxu0 0.0
        %2152 = vmatprep.subr.mxu0 0.0
        %2153 = vmatpush1.msra.mxu0 0.0
        %2154 = vmatprep.subr.mxu0 0.0
        %2155 = vmatpush1.msra.mxu0 0.0
        %2156 = vmatprep.subr.mxu0 0.0
        %2157 = vmatpush1.msra.mxu0 0.0
        %2158 = vmatprep.subr.mxu0 0.0
        %2159 = vmatpush1.msra.mxu0 0.0
        %2160 = vmatprep.subr.mxu0 0.0
        %2161 = vmatpush1.msra.mxu0 0.0
        %2162 = vmatprep.subr.mxu0 0.0
        %2163 = vmatpush1.msra.mxu0 0.0
        %2164 = vmatprep.subr.mxu0 0.0
        %2165 = vmatpush1.msra.mxu0 %v2132
        %2166 = vmatprep.subr.mxu0 0.0
        %2167 = vmatpush2.msra.mxu0 0.0
        %2168 = vmatprep.subr.mxu0 0.0
        %2169 = vmatpush2.msra.mxu0 0.0
        %2170 = vmatprep.subr.mxu0 0.0
        %2171 = vmatpush2.msra.mxu0 0.0
        %2172 = vmatprep.subr.mxu0 0.0
        %2173 = vmatpush2.msra.mxu0 0.0
        %2174 = vmatprep.subr.mxu0 0.0
        %2175 = vmatpush2.msra.mxu0 0.0
        %2176 = vmatprep.subr.mxu0 0.0
        %2177 = vmatpush2.msra.mxu0 0.0
        %2178 = vmatprep.subr.mxu0 0.0
        %2179 = vmatpush2.msra.mxu0 0.0
        %2180 = vmatprep.subr.mxu0 0.0
        %2181 = vmatpush2.msra.mxu0 0.0
        %2182 = vmatprep.subr.mxu0 0.0
        %2183 = vmatpush2.msra.mxu0 0.0
        %2184 = vmatprep.subr.mxu0 0.0
        %2185 = vmatpush2.msra.mxu0 0.0
        %2186 = vmatprep.subr.mxu0 0.0
        %2187 = vmatpush2.msra.mxu0 0.0
        %2188 = vmatprep.subr.mxu0 0.0
        %2189 = vmatpush2.msra.mxu0 0.0
        %2190 = vmatprep.subr.mxu0 0.0
        %2191 = vmatpush2.msra.mxu0 0.0
        %2192 = vmatprep.subr.mxu0 0.0
        %2193 = vmatpush2.msra.mxu0 0.0
        %2194 = vmatprep.subr.mxu0 0.0
        %2195 = vmatpush2.msra.mxu0 0.0
        %2196 = vmatprep.subr.mxu0 0.0
        %2197 = vmatpush2.msra.mxu0 0.0
        %2198 = vmatprep.mubr.f32.mxu0 0.0
        %2199 = vmatmul.mubr.f32.gmra.mxu0 %v2129
        %v2200 = vpop.f32.mrf.mxu0
        %v2201 = vadd.f32 %v2126, %v2200
        %v2202 = vpop.f32.mrf.mxu0
        %2203 = vdwg.mxu0
        %v2204 = vadd.f32 %v2201, %v1996
        %2205 = vst [vmem:[%s447] sm:$0xf] %v2204
        %s2206 = sand.u32 %s327, 1
        %s2207 = scalar_lea.sflag [#allocation4], %s2206
        %s2208 = sand.u32 %s327, 1
        %s2209 = smul.addr %s2208, 4
        %s2210 = scalar_lea.vmem [#allocation3], %s2209
        // Predicated region
        $region77: #{tpu_custom_call.1} parent=71 // pred_check
          %p2211 = pneg %p337
        $region78: #{tpu_custom_call.1} parent=71 // pred_check_branch
          %2213 = sbr.rel (%p2211) target = $region80
        $region79: #{tpu_custom_call.1} parent=71 // pred_region
          %s2215 = ssub.s32 64, 64
          %2216 = vsyncadd %s2207, %s2215
          %s2217 = smul.addr %s31, 2
          %s2218 = sadd.s32 %s32, %s2217
          %s2219 = smul.addr %s2218, 64
          %s2220 = scalar_lea.hbm %s13, %s2219
          %s2222 = sshll.u32 %s2210, 4
          %s2223 = int_to_ptr.vmem [resolvable:$true] %s2222
          %2225 = dma.vmem_to_hbm [thread:$0]  %s2223, 64, %s2220, %s2207
        $region80: #{tpu_custom_call.1} parent=71 // pred_fallthru
          _
      $region72: #{tpu_custom_call.1} parent=5 // pred_fallthru
        _
      %p2226 = scmp.le.s32.totalorder 2, %s22
      // Predicated region
      $region81: #{tpu_custom_call.1} parent=5 // pred_check
        %p2227 = pneg %p2226
      $region82: #{tpu_custom_call.1} parent=5 // pred_check_branch
        %2229 = sbr.rel (%p2227) target = $region84
      $region83: #{tpu_custom_call.1} parent=5 // pred_region
        %s2230 = ssub.s32 %s22, 2
        // Predicated region
        $region85: #{tpu_custom_call.1} parent=83 // pred_check
          %p2231 = pneg %p343
        $region86: #{tpu_custom_call.1} parent=83 // pred_check_branch
          %2233 = sbr.rel (%p2231) target = $region88
        $region87: #{tpu_custom_call.1} parent=83 // pred_region
          %s2234 = sand.u32 %s328, 1
          %s2235 = scalar_lea.sflag [#allocation4], %s2234
          %s2236 = sand.u32 %s328, 1
          %s2237 = smul.addr %s2236, 4
          %s2238 = scalar_lea.vmem [#allocation3], %s2237
          %2239 = dma.done %s2235, 64
        $region88: #{tpu_custom_call.1} parent=83 // pred_fallthru
          _
      $region84: #{tpu_custom_call.1} parent=5 // pred_fallthru
        _
    $region6: #{tpu_custom_call.1} parent=1 // loop_footer
      %s26 = sadd.s32 1, %s22
    $region7: #{tpu_custom_call.1} parent=1 // loop_footer_branch
      %21 = sbr.rel target = $region3
    $region8: #{tpu_custom_call.1} parent=1 // loop_exit
      _
    %2240 = vsyncpa [#allocation4], 1
    %s2241 = scalar_lea.sflag [#allocation4], 1
    %2242 = vsyncpa %s2241, 1

</llo_original>
